<compile_context>
chip_gen: v6e
topology: v6e:2x2x1
jax: 0.10.0
libtpu: 0.0.40
codegen_flags: <defaults>
</compile_context>

<pallas_src>
import functools
import math

import jax
import jax.numpy as jnp
from jax.experimental import pallas as pl
from jax.experimental.pallas import tpu as pltpu


# ---------------------------------------------------------------------------
# Fused kernel: depthwise 3x3 + bias + ReLU + pointwise 1x1 + bias, computed
# for P projections that share the same input tile.
# ---------------------------------------------------------------------------
def _make_fused_sepconv_kernel(n_proj, H, W, C, D):
    def kernel(xp_ref, dww_ref, dwb_ref, pww_ref, pwb_ref, *o_refs):
        # xp_ref : (H+2, W+2, C)  zero-padded input image (one batch element)
        # dww_ref: (P, 3, 3, C)   depthwise weights  (VMEM-resident)
        # dwb_ref: (P, 1, C)      depthwise biases
        # pww_ref: (P, C, D)      pointwise weights  (VMEM-resident)
        # pwb_ref: (P, 1, D)      pointwise biases
        # o_refs : P output tiles, each (H, W, D)
        xp = xp_ref[...]
        # Three W-shifted (sublane) views, computed once and shared by every
        # projection and every dh tap; the dh slices below only touch the
        # leading (non-vreg) H axis.
        xw = [xp[:, dw:dw + W, :] for dw in range(3)]

        for p in range(n_proj):
            # ---- depthwise 3x3 conv + bias + ReLU (f32 accumulation) ------
            acc = jnp.zeros((H, W, C), jnp.float32)
            for dh in range(3):
                for dw in range(3):
                    tap = dww_ref[p, dh, dw:dw + 1, :].astype(jnp.float32)  # (1, C)
                    acc = acc + xw[dw][dh:dh + H] * tap
            acc = acc + dwb_ref[p].astype(jnp.float32)                       # (1, C)
            y = jnp.maximum(acc, 0.0)                                        # (H, W, C)

            # ---- pointwise 1x1 conv == matmul with resident (C, D) weight -
            pw = pww_ref[p]                                                  # (C, D)
            pwb = pwb_ref[p].astype(jnp.float32)                             # (1, D)
            yc = y.astype(pw.dtype)
            o_ref = o_refs[p]
            # Per-row MXU dots keep every matmul operand rank-2, so no
            # sublane-merging reshape of the (H, W, C) value is needed.
            for h in range(H):
                row = jnp.dot(yc[h], pw, preferred_element_type=jnp.float32)
                o_ref[h] = (row + pwb).astype(o_ref.dtype)

    return kernel


def fused_sepconv(x_bhwc, params_list):
    """Run P SepConv2d projections over one shared input with a single fused kernel.

    x_bhwc     : (B, H, W, C)
    params_list: list of (dw_w (3,3,C), dw_b (1,C), pw_w (C,D), pw_b (1,D))
    Returns    : list of P arrays, each (B, H*W, D)
    """
    B, H, W, C = x_bhwc.shape
    P = len(params_list)
    D = params_list[0][2].shape[1]

    dww = jnp.stack([p[0] for p in params_list])   # (P, 3, 3, C)
    dwb = jnp.stack([p[1] for p in params_list])   # (P, 1, C)
    pww = jnp.stack([p[2] for p in params_list])   # (P, C, D)
    pwb = jnp.stack([p[3] for p in params_list])   # (P, 1, D)

    # "SAME" zero padding done once per *distinct* input (shared by all P
    # projections, so x is read from HBM once, not 3x).
    # TODO(synk): fold the 1-pixel halo into the kernel to drop this copy too.
    xp = jnp.pad(x_bhwc, ((0, 0), (1, 1), (1, 1), (0, 0)))

    # Per-grid-step VMEM footprint: double-buffered input + P double-buffered
    # outputs + resident weights + f32 depthwise working value.
    isz = x_bhwc.dtype.itemsize
    est = (2 * (H + 2) * (W + 2) * C * isz
           + 2 * P * H * W * D * isz
           + P * (9 * C + C + C * D + D) * isz
           + 2 * H * W * C * 4)
    vmem_budget = 32 * 1024 * 1024   # safe scoped-VMEM budget on v5e/v6e/v7x
    if est > vmem_budget // 2:
        # TODO(synk): add a spatial (row-tile + halo) grid axis so VMEM stays
        # bounded for very large H*W / C instead of bailing out.
        raise NotImplementedError(
            f"fused SepConv tile needs ~{est} bytes of VMEM; add spatial tiling")

    kernel = _make_fused_sepconv_kernel(P, H, W, C, D)

    def full_spec(shape):
        return pl.BlockSpec(shape, lambda b: (0,) * len(shape))

    outs = pl.pallas_call(
        kernel,
        out_shape=tuple(
            jax.ShapeDtypeStruct((B, H, W, D), x_bhwc.dtype) for _ in range(P)),
        grid=(B,),
        in_specs=[
            pl.BlockSpec((pl.Squeezed(), H + 2, W + 2, C),
                         lambda b: (b, 0, 0, 0)),
            full_spec((P, 3, 3, C)),
            full_spec((P, 1, C)),
            full_spec((P, C, D)),
            full_spec((P, 1, D)),
        ],
        out_specs=tuple(
            pl.BlockSpec((pl.Squeezed(), H, W, D), lambda b: (b, 0, 0, 0))
            for _ in range(P)),
        compiler_params=pltpu.CompilerParams(
            dimension_semantics=("parallel",),
            vmem_limit_bytes=vmem_budget),
    )(xp, dww, dwb, pww, pwb)

    if not isinstance(outs, (tuple, list)):
        outs = (outs,)
    return [o.reshape(B, H * W, D) for o in outs]


# ---------------------------------------------------------------------------
# ConvProjection forward
# ---------------------------------------------------------------------------
def conv_projection_forward(x, params, heads, attn_kv=None):
    """ConvProjection.forward.

    Args:
      x: (B, N, C) with N a perfect square.
      params: dict with "q","k","v" -> (dw_w (3,3,C), dw_b (1,C),
                                        pw_w (C,inner_dim), pw_b (1,inner_dim))
      heads: number of attention heads (inner_dim % heads == 0).
      attn_kv: optional (B, N, C); defaults to x.
    Returns:
      q, k, v each of shape (B, heads, N, inner_dim // heads).
    """
    B, N, C = x.shape
    H = W = int(math.sqrt(N))
    assert H * W == N, "sequence length must be a perfect square"

    x_bhwc = x.reshape(B, H, W, C)                 # 'b (l w) c -> b l w c' (NHWC)
    if attn_kv is None:
        # Shared input: one kernel reads x once and emits q, k, v.
        q, k, v = fused_sepconv(
            x_bhwc, [params["q"], params["k"], params["v"]])
    else:
        kv_bhwc = attn_kv.reshape(B, H, W, C)
        (q,) = fused_sepconv(x_bhwc, [params["q"]])
        k, v = fused_sepconv(kv_bhwc, [params["k"], params["v"]])

    def split_heads(t):                            # 'b n (h d) -> b h n d'
        Bb, Nn, Dd = t.shape
        # Required output layout of the module; a downstream attention kernel
        # could fold this into its BlockSpec instead (left as XLA glue here).
        return t.reshape(Bb, Nn, heads, Dd // heads).transpose(0, 2, 1, 3)

    return split_heads(q), split_heads(k), split_heads(v)


# ---------------------------------------------------------------------------
# Pure-JAX reference (for correctness check)
# ---------------------------------------------------------------------------
def conv_projection_reference(x, params, heads, attn_kv=None):
    B, N, C = x.shape
    H = W = int(math.sqrt(N))
    x_bhwc = x.reshape(B, H, W, C)
    kv_bhwc = x_bhwc if attn_kv is None else attn_kv.reshape(B, H, W, C)

    def sep(xi, p):
        dw_w, dw_b, pw_w, pw_b = p
        Cc = xi.shape[-1]
        kern = dw_w.reshape(3, 3, 1, Cc)
        y = jax.lax.conv_general_dilated(
            xi, kern, window_strides=(1, 1), padding="SAME",
            dimension_numbers=("NHWC", "HWIO", "NHWC"),
            feature_group_count=Cc)
        y = jnp.maximum(y + dw_b.reshape(1, 1, 1, Cc), 0.0)
        out = jnp.einsum("bhwc,cd->bhwd", y, pw_w) + pw_b.reshape(1, 1, 1, -1)
        return out.reshape(B, H * W, -1)

    def split(t):
        Bb, Nn, Dd = t.shape
        return t.reshape(Bb, Nn, heads, Dd // heads).transpose(0, 2, 1, 3)

    return (split(sep(x_bhwc, params["q"])),
            split(sep(kv_bhwc, params["k"])),
            split(sep(kv_bhwc, params["v"])))


if __name__ == "__main__":
    # Small shapes consistent with the module: B=2, H=W=4 -> N=16, dim=32,
    # heads=8, dim_head=8 -> inner_dim=64.
    key = jax.random.PRNGKey(0)
    B, H, W = 2, 4, 4
    N = H * W
    dim = 32
    heads = 8
    dim_head = 8
    inner_dim = heads * dim_head

    keys = jax.random.split(key, 13)
    x = jax.random.normal(keys[0], (B, N, dim), dtype=jnp.float32)

    def init_sepconv(k0, k1, k2, k3):
        dw_w = 0.1 * jax.random.normal(k0, (3, 3, dim), jnp.float32)
        dw_b = 0.1 * jax.random.normal(k1, (1, dim), jnp.float32)
        pw_w = 0.1 * jax.random.normal(k2, (dim, inner_dim), jnp.float32)
        pw_b = 0.1 * jax.random.normal(k3, (1, inner_dim), jnp.float32)
        return dw_w, dw_b, pw_w, pw_b

    params = {
        "q": init_sepconv(*keys[1:5]),
        "k": init_sepconv(*keys[5:9]),
        "v": init_sepconv(*keys[9:13]),
    }

    # jit the whole forward so the reshape/pad glue is CSE'd and dispatch
    # overhead is amortized (review item).
    fwd = jax.jit(functools.partial(conv_projection_forward, heads=heads))
    q, k, v = jax.block_until_ready(fwd(x, params))

    q_ref, k_ref, v_ref = conv_projection_reference(x, params, heads)

    assert q.shape == (B, heads, N, dim_head)
    assert k.shape == (B, heads, N, dim_head)
    assert v.shape == (B, heads, N, dim_head)
    for got, ref in ((q, q_ref), (k, k_ref), (v, v_ref)):
        err = float(jnp.max(jnp.abs(got - ref)))
        assert jnp.allclose(got, ref, atol=1e-4, rtol=1e-4), err

    print("KERNEL_OK")
</pallas_src>

<mosaic_0001>
module attributes {stable_mosaic.version = 11 : i64} {
  func.func @kernel(%arg0: i32, %arg1: memref<1x6x6x32xf32, #tpu.memory_space<vmem>>, %arg2: memref<3x3x3x32xf32, #tpu.memory_space<vmem>>, %arg3: memref<3x1x32xf32, #tpu.memory_space<vmem>>, %arg4: memref<3x32x64xf32, #tpu.memory_space<vmem>>, %arg5: memref<3x1x64xf32, #tpu.memory_space<vmem>>, %arg6: memref<1x4x4x64xf32, #tpu.memory_space<vmem>>, %arg7: memref<1x4x4x64xf32, #tpu.memory_space<vmem>>, %arg8: memref<1x4x4x64xf32, #tpu.memory_space<vmem>>) attributes {dimension_semantics = [#tpu.dimension_semantics<parallel>], iteration_bounds = array<i64: 2>, scalar_prefetch = 0 : i64, scratch_operands = 0 : i64, tpu.core_type = #tpu.core_type<tc>, window_params = [{transform_indices = @transform_0, window_bounds = array<i64: 1, 6, 6, 32>}, {pipeline_mode = #tpu.pipeline_mode<synchronous>, transform_indices = @transform_1, window_bounds = array<i64: 3, 3, 3, 32>}, {pipeline_mode = #tpu.pipeline_mode<synchronous>, transform_indices = @transform_2, window_bounds = array<i64: 3, 1, 32>}, {pipeline_mode = #tpu.pipeline_mode<synchronous>, transform_indices = @transform_3, window_bounds = array<i64: 3, 32, 64>}, {pipeline_mode = #tpu.pipeline_mode<synchronous>, transform_indices = @transform_4, window_bounds = array<i64: 3, 1, 64>}, {transform_indices = @transform_5, window_bounds = array<i64: 1, 4, 4, 64>}, {transform_indices = @transform_6, window_bounds = array<i64: 1, 4, 4, 64>}, {transform_indices = @transform_7, window_bounds = array<i64: 1, 4, 4, 64>}]} {
    %c0 = arith.constant 0 : index
    %c0_0 = arith.constant 0 : index
    %c0_1 = arith.constant 0 : index
    %c0_2 = arith.constant 0 : index
    %0 = vector.load %arg1[%c0, %c0_0, %c0_1, %c0_2] : memref<1x6x6x32xf32, #tpu.memory_space<vmem>>, vector<1x6x6x32xf32>
    %1 = vector.shape_cast %0 : vector<1x6x6x32xf32> to vector<6x6x32xf32>
    %2 = vector.extract_strided_slice %1 {offsets = [0, 0, 0], sizes = [6, 4, 32], strides = [1, 1, 1]} : vector<6x6x32xf32> to vector<6x4x32xf32>
    %3 = vector.extract_strided_slice %1 {offsets = [0, 1, 0], sizes = [6, 4, 32], strides = [1, 1, 1]} : vector<6x6x32xf32> to vector<6x4x32xf32>
    %4 = vector.extract_strided_slice %1 {offsets = [0, 2, 0], sizes = [6, 4, 32], strides = [1, 1, 1]} : vector<6x6x32xf32> to vector<6x4x32xf32>
    %cst = arith.constant 0.000000e+00 : f32
    %5 = vector.broadcast %cst : f32 to vector<4x4x32xf32>
    %c0_3 = arith.constant 0 : index
    %c0_4 = arith.constant 0 : index
    %c0_5 = arith.constant 0 : index
    %c0_6 = arith.constant 0 : index
    %6 = vector.load %arg2[%c0_3, %c0_4, %c0_5, %c0_6] : memref<3x3x3x32xf32, #tpu.memory_space<vmem>>, vector<1x1x1x32xf32>
    %7 = vector.shape_cast %6 : vector<1x1x1x32xf32> to vector<1x32xf32>
    %8 = vector.extract_strided_slice %2 {offsets = [0, 0, 0], sizes = [4, 4, 32], strides = [1, 1, 1]} : vector<6x4x32xf32> to vector<4x4x32xf32>
    %9 = vector.shape_cast %7 : vector<1x32xf32> to vector<1x1x32xf32>
    %10 = vector.broadcast %9 : vector<1x1x32xf32> to vector<4x4x32xf32>
    %11 = arith.mulf %8, %10 : vector<4x4x32xf32>
    %12 = arith.addf %5, %11 : vector<4x4x32xf32>
    %c0_7 = arith.constant 0 : index
    %c0_8 = arith.constant 0 : index
    %c1 = arith.constant 1 : index
    %c0_9 = arith.constant 0 : index
    %13 = vector.load %arg2[%c0_7, %c0_8, %c1, %c0_9] : memref<3x3x3x32xf32, #tpu.memory_space<vmem>>, vector<1x1x1x32xf32>
    %14 = vector.shape_cast %13 : vector<1x1x1x32xf32> to vector<1x32xf32>
    %15 = vector.extract_strided_slice %3 {offsets = [0, 0, 0], sizes = [4, 4, 32], strides = [1, 1, 1]} : vector<6x4x32xf32> to vector<4x4x32xf32>
    %16 = vector.shape_cast %14 : vector<1x32xf32> to vector<1x1x32xf32>
    %17 = vector.broadcast %16 : vector<1x1x32xf32> to vector<4x4x32xf32>
    %18 = arith.mulf %15, %17 : vector<4x4x32xf32>
    %19 = arith.addf %12, %18 : vector<4x4x32xf32>
    %c0_10 = arith.constant 0 : index
    %c0_11 = arith.constant 0 : index
    %c2 = arith.constant 2 : index
    %c0_12 = arith.constant 0 : index
    %20 = vector.load %arg2[%c0_10, %c0_11, %c2, %c0_12] : memref<3x3x3x32xf32, #tpu.memory_space<vmem>>, vector<1x1x1x32xf32>
    %21 = vector.shape_cast %20 : vector<1x1x1x32xf32> to vector<1x32xf32>
    %22 = vector.extract_strided_slice %4 {offsets = [0, 0, 0], sizes = [4, 4, 32], strides = [1, 1, 1]} : vector<6x4x32xf32> to vector<4x4x32xf32>
    %23 = vector.shape_cast %21 : vector<1x32xf32> to vector<1x1x32xf32>
    %24 = vector.broadcast %23 : vector<1x1x32xf32> to vector<4x4x32xf32>
    %25 = arith.mulf %22, %24 : vector<4x4x32xf32>
    %26 = arith.addf %19, %25 : vector<4x4x32xf32>
    %c0_13 = arith.constant 0 : index
    %c1_14 = arith.constant 1 : index
    %c0_15 = arith.constant 0 : index
    %c0_16 = arith.constant 0 : index
    %27 = vector.load %arg2[%c0_13, %c1_14, %c0_15, %c0_16] : memref<3x3x3x32xf32, #tpu.memory_space<vmem>>, vector<1x1x1x32xf32>
    %28 = vector.shape_cast %27 : vector<1x1x1x32xf32> to vector<1x32xf32>
    %29 = vector.extract_strided_slice %2 {offsets = [1, 0, 0], sizes = [4, 4, 32], strides = [1, 1, 1]} : vector<6x4x32xf32> to vector<4x4x32xf32>
    %30 = vector.shape_cast %28 : vector<1x32xf32> to vector<1x1x32xf32>
    %31 = vector.broadcast %30 : vector<1x1x32xf32> to vector<4x4x32xf32>
    %32 = arith.mulf %29, %31 : vector<4x4x32xf32>
    %33 = arith.addf %26, %32 : vector<4x4x32xf32>
    %c0_17 = arith.constant 0 : index
    %c1_18 = arith.constant 1 : index
    %c1_19 = arith.constant 1 : index
    %c0_20 = arith.constant 0 : index
    %34 = vector.load %arg2[%c0_17, %c1_18, %c1_19, %c0_20] : memref<3x3x3x32xf32, #tpu.memory_space<vmem>>, vector<1x1x1x32xf32>
    %35 = vector.shape_cast %34 : vector<1x1x1x32xf32> to vector<1x32xf32>
    %36 = vector.extract_strided_slice %3 {offsets = [1, 0, 0], sizes = [4, 4, 32], strides = [1, 1, 1]} : vector<6x4x32xf32> to vector<4x4x32xf32>
    %37 = vector.shape_cast %35 : vector<1x32xf32> to vector<1x1x32xf32>
    %38 = vector.broadcast %37 : vector<1x1x32xf32> to vector<4x4x32xf32>
    %39 = arith.mulf %36, %38 : vector<4x4x32xf32>
    %40 = arith.addf %33, %39 : vector<4x4x32xf32>
    %c0_21 = arith.constant 0 : index
    %c1_22 = arith.constant 1 : index
    %c2_23 = arith.constant 2 : index
    %c0_24 = arith.constant 0 : index
    %41 = vector.load %arg2[%c0_21, %c1_22, %c2_23, %c0_24] : memref<3x3x3x32xf32, #tpu.memory_space<vmem>>, vector<1x1x1x32xf32>
    %42 = vector.shape_cast %41 : vector<1x1x1x32xf32> to vector<1x32xf32>
    %43 = vector.extract_strided_slice %4 {offsets = [1, 0, 0], sizes = [4, 4, 32], strides = [1, 1, 1]} : vector<6x4x32xf32> to vector<4x4x32xf32>
    %44 = vector.shape_cast %42 : vector<1x32xf32> to vector<1x1x32xf32>
    %45 = vector.broadcast %44 : vector<1x1x32xf32> to vector<4x4x32xf32>
    %46 = arith.mulf %43, %45 : vector<4x4x32xf32>
    %47 = arith.addf %40, %46 : vector<4x4x32xf32>
    %c0_25 = arith.constant 0 : index
    %c2_26 = arith.constant 2 : index
    %c0_27 = arith.constant 0 : index
    %c0_28 = arith.constant 0 : index
    %48 = vector.load %arg2[%c0_25, %c2_26, %c0_27, %c0_28] : memref<3x3x3x32xf32, #tpu.memory_space<vmem>>, vector<1x1x1x32xf32>
    %49 = vector.shape_cast %48 : vector<1x1x1x32xf32> to vector<1x32xf32>
    %50 = vector.extract_strided_slice %2 {offsets = [2, 0, 0], sizes = [4, 4, 32], strides = [1, 1, 1]} : vector<6x4x32xf32> to vector<4x4x32xf32>
    %51 = vector.shape_cast %49 : vector<1x32xf32> to vector<1x1x32xf32>
    %52 = vector.broadcast %51 : vector<1x1x32xf32> to vector<4x4x32xf32>
    %53 = arith.mulf %50, %52 : vector<4x4x32xf32>
    %54 = arith.addf %47, %53 : vector<4x4x32xf32>
    %c0_29 = arith.constant 0 : index
    %c2_30 = arith.constant 2 : index
    %c1_31 = arith.constant 1 : index
    %c0_32 = arith.constant 0 : index
    %55 = vector.load %arg2[%c0_29, %c2_30, %c1_31, %c0_32] : memref<3x3x3x32xf32, #tpu.memory_space<vmem>>, vector<1x1x1x32xf32>
    %56 = vector.shape_cast %55 : vector<1x1x1x32xf32> to vector<1x32xf32>
    %57 = vector.extract_strided_slice %3 {offsets = [2, 0, 0], sizes = [4, 4, 32], strides = [1, 1, 1]} : vector<6x4x32xf32> to vector<4x4x32xf32>
    %58 = vector.shape_cast %56 : vector<1x32xf32> to vector<1x1x32xf32>
    %59 = vector.broadcast %58 : vector<1x1x32xf32> to vector<4x4x32xf32>
    %60 = arith.mulf %57, %59 : vector<4x4x32xf32>
    %61 = arith.addf %54, %60 : vector<4x4x32xf32>
    %c0_33 = arith.constant 0 : index
    %c2_34 = arith.constant 2 : index
    %c2_35 = arith.constant 2 : index
    %c0_36 = arith.constant 0 : index
    %62 = vector.load %arg2[%c0_33, %c2_34, %c2_35, %c0_36] : memref<3x3x3x32xf32, #tpu.memory_space<vmem>>, vector<1x1x1x32xf32>
    %63 = vector.shape_cast %62 : vector<1x1x1x32xf32> to vector<1x32xf32>
    %64 = vector.extract_strided_slice %4 {offsets = [2, 0, 0], sizes = [4, 4, 32], strides = [1, 1, 1]} : vector<6x4x32xf32> to vector<4x4x32xf32>
    %65 = vector.shape_cast %63 : vector<1x32xf32> to vector<1x1x32xf32>
    %66 = vector.broadcast %65 : vector<1x1x32xf32> to vector<4x4x32xf32>
    %67 = arith.mulf %64, %66 : vector<4x4x32xf32>
    %68 = arith.addf %61, %67 : vector<4x4x32xf32>
    %c0_37 = arith.constant 0 : index
    %c0_38 = arith.constant 0 : index
    %c0_39 = arith.constant 0 : index
    %69 = vector.load %arg3[%c0_37, %c0_38, %c0_39] : memref<3x1x32xf32, #tpu.memory_space<vmem>>, vector<1x1x32xf32>
    %70 = vector.shape_cast %69 : vector<1x1x32xf32> to vector<1x32xf32>
    %71 = vector.shape_cast %70 : vector<1x32xf32> to vector<1x1x32xf32>
    %72 = vector.broadcast %71 : vector<1x1x32xf32> to vector<4x4x32xf32>
    %73 = arith.addf %68, %72 : vector<4x4x32xf32>
    %cst_40 = arith.constant 0.000000e+00 : f32
    %74 = vector.broadcast %cst_40 : f32 to vector<4x4x32xf32>
    %75 = arith.maximumf %73, %74 : vector<4x4x32xf32>
    %c0_41 = arith.constant 0 : index
    %c0_42 = arith.constant 0 : index
    %c0_43 = arith.constant 0 : index
    %76 = vector.load %arg4[%c0_41, %c0_42, %c0_43] : memref<3x32x64xf32, #tpu.memory_space<vmem>>, vector<1x32x64xf32>
    %77 = vector.shape_cast %76 : vector<1x32x64xf32> to vector<32x64xf32>
    %c0_44 = arith.constant 0 : index
    %c0_45 = arith.constant 0 : index
    %c0_46 = arith.constant 0 : index
    %78 = vector.load %arg5[%c0_44, %c0_45, %c0_46] : memref<3x1x64xf32, #tpu.memory_space<vmem>>, vector<1x1x64xf32>
    %79 = vector.shape_cast %78 : vector<1x1x64xf32> to vector<1x64xf32>
    %80 = vector.extract_strided_slice %75 {offsets = [0, 0, 0], sizes = [1, 4, 32], strides = [1, 1, 1]} : vector<4x4x32xf32> to vector<1x4x32xf32>
    %81 = vector.shape_cast %80 : vector<1x4x32xf32> to vector<4x32xf32>
    %cst_47 = arith.constant dense<0.000000e+00> : vector<4x64xf32>
    %82 = tpu.matmul %81, %77, %cst_47 {dimension_numbers = #tpu.dot_dimension_numbers<[1], [0], [0], [1], [0, 0, 1, 1], [], []>} : vector<4x32xf32>, vector<32x64xf32>, vector<4x64xf32> -> vector<4x64xf32>
    %83 = vector.broadcast %79 : vector<1x64xf32> to vector<4x64xf32>
    %84 = arith.addf %82, %83 : vector<4x64xf32>
    %c0_48 = arith.constant 0 : index
    %c0_49 = arith.constant 0 : index
    %c0_50 = arith.constant 0 : index
    %c0_51 = arith.constant 0 : index
    %85 = vector.load %arg6[%c0_48, %c0_49, %c0_50, %c0_51] : memref<1x4x4x64xf32, #tpu.memory_space<vmem>>, vector<1x1x4x64xf32>
    %86 = vector.shape_cast %85 : vector<1x1x4x64xf32> to vector<4x64xf32>
    %87 = vector.shape_cast %84 : vector<4x64xf32> to vector<1x1x4x64xf32>
    tpu.vector_store %arg6[%c0_48, %c0_49, %c0_50, %c0_51], %87 {strides = array<i32>} : memref<1x4x4x64xf32, #tpu.memory_space<vmem>>, vector<1x1x4x64xf32>,
    %88 = vector.extract_strided_slice %75 {offsets = [1, 0, 0], sizes = [1, 4, 32], strides = [1, 1, 1]} : vector<4x4x32xf32> to vector<1x4x32xf32>
    %89 = vector.shape_cast %88 : vector<1x4x32xf32> to vector<4x32xf32>
    %cst_52 = arith.constant dense<0.000000e+00> : vector<4x64xf32>
    %90 = tpu.matmul %89, %77, %cst_52 {dimension_numbers = #tpu.dot_dimension_numbers<[1], [0], [0], [1], [0, 0, 1, 1], [], []>} : vector<4x32xf32>, vector<32x64xf32>, vector<4x64xf32> -> vector<4x64xf32>
    %91 = vector.broadcast %79 : vector<1x64xf32> to vector<4x64xf32>
    %92 = arith.addf %90, %91 : vector<4x64xf32>
    %c0_53 = arith.constant 0 : index
    %c1_54 = arith.constant 1 : index
    %c0_55 = arith.constant 0 : index
    %c0_56 = arith.constant 0 : index
    %93 = vector.load %arg6[%c0_53, %c1_54, %c0_55, %c0_56] : memref<1x4x4x64xf32, #tpu.memory_space<vmem>>, vector<1x1x4x64xf32>
    %94 = vector.shape_cast %93 : vector<1x1x4x64xf32> to vector<4x64xf32>
    %95 = vector.shape_cast %92 : vector<4x64xf32> to vector<1x1x4x64xf32>
    tpu.vector_store %arg6[%c0_53, %c1_54, %c0_55, %c0_56], %95 {strides = array<i32>} : memref<1x4x4x64xf32, #tpu.memory_space<vmem>>, vector<1x1x4x64xf32>,
    %96 = vector.extract_strided_slice %75 {offsets = [2, 0, 0], sizes = [1, 4, 32], strides = [1, 1, 1]} : vector<4x4x32xf32> to vector<1x4x32xf32>
    %97 = vector.shape_cast %96 : vector<1x4x32xf32> to vector<4x32xf32>
    %cst_57 = arith.constant dense<0.000000e+00> : vector<4x64xf32>
    %98 = tpu.matmul %97, %77, %cst_57 {dimension_numbers = #tpu.dot_dimension_numbers<[1], [0], [0], [1], [0, 0, 1, 1], [], []>} : vector<4x32xf32>, vector<32x64xf32>, vector<4x64xf32> -> vector<4x64xf32>
    %99 = vector.broadcast %79 : vector<1x64xf32> to vector<4x64xf32>
    %100 = arith.addf %98, %99 : vector<4x64xf32>
    %c0_58 = arith.constant 0 : index
    %c2_59 = arith.constant 2 : index
    %c0_60 = arith.constant 0 : index
    %c0_61 = arith.constant 0 : index
    %101 = vector.load %arg6[%c0_58, %c2_59, %c0_60, %c0_61] : memref<1x4x4x64xf32, #tpu.memory_space<vmem>>, vector<1x1x4x64xf32>
    %102 = vector.shape_cast %101 : vector<1x1x4x64xf32> to vector<4x64xf32>
    %103 = vector.shape_cast %100 : vector<4x64xf32> to vector<1x1x4x64xf32>
    tpu.vector_store %arg6[%c0_58, %c2_59, %c0_60, %c0_61], %103 {strides = array<i32>} : memref<1x4x4x64xf32, #tpu.memory_space<vmem>>, vector<1x1x4x64xf32>,
    %104 = vector.extract_strided_slice %75 {offsets = [3, 0, 0], sizes = [1, 4, 32], strides = [1, 1, 1]} : vector<4x4x32xf32> to vector<1x4x32xf32>
    %105 = vector.shape_cast %104 : vector<1x4x32xf32> to vector<4x32xf32>
    %cst_62 = arith.constant dense<0.000000e+00> : vector<4x64xf32>
    %106 = tpu.matmul %105, %77, %cst_62 {dimension_numbers = #tpu.dot_dimension_numbers<[1], [0], [0], [1], [0, 0, 1, 1], [], []>} : vector<4x32xf32>, vector<32x64xf32>, vector<4x64xf32> -> vector<4x64xf32>
    %107 = vector.broadcast %79 : vector<1x64xf32> to vector<4x64xf32>
    %108 = arith.addf %106, %107 : vector<4x64xf32>
    %c0_63 = arith.constant 0 : index
    %c3 = arith.constant 3 : index
    %c0_64 = arith.constant 0 : index
    %c0_65 = arith.constant 0 : index
    %109 = vector.load %arg6[%c0_63, %c3, %c0_64, %c0_65] : memref<1x4x4x64xf32, #tpu.memory_space<vmem>>, vector<1x1x4x64xf32>
    %110 = vector.shape_cast %109 : vector<1x1x4x64xf32> to vector<4x64xf32>
    %111 = vector.shape_cast %108 : vector<4x64xf32> to vector<1x1x4x64xf32>
    tpu.vector_store %arg6[%c0_63, %c3, %c0_64, %c0_65], %111 {strides = array<i32>} : memref<1x4x4x64xf32, #tpu.memory_space<vmem>>, vector<1x1x4x64xf32>,
    %cst_66 = arith.constant 0.000000e+00 : f32
    %112 = vector.broadcast %cst_66 : f32 to vector<4x4x32xf32>
    %c1_67 = arith.constant 1 : index
    %c0_68 = arith.constant 0 : index
    %c0_69 = arith.constant 0 : index
    %c0_70 = arith.constant 0 : index
    %113 = vector.load %arg2[%c1_67, %c0_68, %c0_69, %c0_70] : memref<3x3x3x32xf32, #tpu.memory_space<vmem>>, vector<1x1x1x32xf32>
    %114 = vector.shape_cast %113 : vector<1x1x1x32xf32> to vector<1x32xf32>
    %115 = vector.extract_strided_slice %2 {offsets = [0, 0, 0], sizes = [4, 4, 32], strides = [1, 1, 1]} : vector<6x4x32xf32> to vector<4x4x32xf32>
    %116 = vector.shape_cast %114 : vector<1x32xf32> to vector<1x1x32xf32>
    %117 = vector.broadcast %116 : vector<1x1x32xf32> to vector<4x4x32xf32>
    %118 = arith.mulf %115, %117 : vector<4x4x32xf32>
    %119 = arith.addf %112, %118 : vector<4x4x32xf32>
    %c1_71 = arith.constant 1 : index
    %c0_72 = arith.constant 0 : index
    %c1_73 = arith.constant 1 : index
    %c0_74 = arith.constant 0 : index
    %120 = vector.load %arg2[%c1_71, %c0_72, %c1_73, %c0_74] : memref<3x3x3x32xf32, #tpu.memory_space<vmem>>, vector<1x1x1x32xf32>
    %121 = vector.shape_cast %120 : vector<1x1x1x32xf32> to vector<1x32xf32>
    %122 = vector.extract_strided_slice %3 {offsets = [0, 0, 0], sizes = [4, 4, 32], strides = [1, 1, 1]} : vector<6x4x32xf32> to vector<4x4x32xf32>
    %123 = vector.shape_cast %121 : vector<1x32xf32> to vector<1x1x32xf32>
    %124 = vector.broadcast %123 : vector<1x1x32xf32> to vector<4x4x32xf32>
    %125 = arith.mulf %122, %124 : vector<4x4x32xf32>
    %126 = arith.addf %119, %125 : vector<4x4x32xf32>
    %c1_75 = arith.constant 1 : index
    %c0_76 = arith.constant 0 : index
    %c2_77 = arith.constant 2 : index
    %c0_78 = arith.constant 0 : index
    %127 = vector.load %arg2[%c1_75, %c0_76, %c2_77, %c0_78] : memref<3x3x3x32xf32, #tpu.memory_space<vmem>>, vector<1x1x1x32xf32>
    %128 = vector.shape_cast %127 : vector<1x1x1x32xf32> to vector<1x32xf32>
    %129 = vector.extract_strided_slice %4 {offsets = [0, 0, 0], sizes = [4, 4, 32], strides = [1, 1, 1]} : vector<6x4x32xf32> to vector<4x4x32xf32>
    %130 = vector.shape_cast %128 : vector<1x32xf32> to vector<1x1x32xf32>
    %131 = vector.broadcast %130 : vector<1x1x32xf32> to vector<4x4x32xf32>
    %132 = arith.mulf %129, %131 : vector<4x4x32xf32>
    %133 = arith.addf %126, %132 : vector<4x4x32xf32>
    %c1_79 = arith.constant 1 : index
    %c1_80 = arith.constant 1 : index
    %c0_81 = arith.constant 0 : index
    %c0_82 = arith.constant 0 : index
    %134 = vector.load %arg2[%c1_79, %c1_80, %c0_81, %c0_82] : memref<3x3x3x32xf32, #tpu.memory_space<vmem>>, vector<1x1x1x32xf32>
    %135 = vector.shape_cast %134 : vector<1x1x1x32xf32> to vector<1x32xf32>
    %136 = vector.extract_strided_slice %2 {offsets = [1, 0, 0], sizes = [4, 4, 32], strides = [1, 1, 1]} : vector<6x4x32xf32> to vector<4x4x32xf32>
    %137 = vector.shape_cast %135 : vector<1x32xf32> to vector<1x1x32xf32>
    %138 = vector.broadcast %137 : vector<1x1x32xf32> to vector<4x4x32xf32>
    %139 = arith.mulf %136, %138 : vector<4x4x32xf32>
    %140 = arith.addf %133, %139 : vector<4x4x32xf32>
    %c1_83 = arith.constant 1 : index
    %c1_84 = arith.constant 1 : index
    %c1_85 = arith.constant 1 : index
    %c0_86 = arith.constant 0 : index
    %141 = vector.load %arg2[%c1_83, %c1_84, %c1_85, %c0_86] : memref<3x3x3x32xf32, #tpu.memory_space<vmem>>, vector<1x1x1x32xf32>
    %142 = vector.shape_cast %141 : vector<1x1x1x32xf32> to vector<1x32xf32>
    %143 = vector.extract_strided_slice %3 {offsets = [1, 0, 0], sizes = [4, 4, 32], strides = [1, 1, 1]} : vector<6x4x32xf32> to vector<4x4x32xf32>
    %144 = vector.shape_cast %142 : vector<1x32xf32> to vector<1x1x32xf32>
    %145 = vector.broadcast %144 : vector<1x1x32xf32> to vector<4x4x32xf32>
    %146 = arith.mulf %143, %145 : vector<4x4x32xf32>
    %147 = arith.addf %140, %146 : vector<4x4x32xf32>
    %c1_87 = arith.constant 1 : index
    %c1_88 = arith.constant 1 : index
    %c2_89 = arith.constant 2 : index
    %c0_90 = arith.constant 0 : index
    %148 = vector.load %arg2[%c1_87, %c1_88, %c2_89, %c0_90] : memref<3x3x3x32xf32, #tpu.memory_space<vmem>>, vector<1x1x1x32xf32>
    %149 = vector.shape_cast %148 : vector<1x1x1x32xf32> to vector<1x32xf32>
    %150 = vector.extract_strided_slice %4 {offsets = [1, 0, 0], sizes = [4, 4, 32], strides = [1, 1, 1]} : vector<6x4x32xf32> to vector<4x4x32xf32>
    %151 = vector.shape_cast %149 : vector<1x32xf32> to vector<1x1x32xf32>
    %152 = vector.broadcast %151 : vector<1x1x32xf32> to vector<4x4x32xf32>
    %153 = arith.mulf %150, %152 : vector<4x4x32xf32>
    %154 = arith.addf %147, %153 : vector<4x4x32xf32>
    %c1_91 = arith.constant 1 : index
    %c2_92 = arith.constant 2 : index
    %c0_93 = arith.constant 0 : index
    %c0_94 = arith.constant 0 : index
    %155 = vector.load %arg2[%c1_91, %c2_92, %c0_93, %c0_94] : memref<3x3x3x32xf32, #tpu.memory_space<vmem>>, vector<1x1x1x32xf32>
    %156 = vector.shape_cast %155 : vector<1x1x1x32xf32> to vector<1x32xf32>
    %157 = vector.extract_strided_slice %2 {offsets = [2, 0, 0], sizes = [4, 4, 32], strides = [1, 1, 1]} : vector<6x4x32xf32> to vector<4x4x32xf32>
    %158 = vector.shape_cast %156 : vector<1x32xf32> to vector<1x1x32xf32>
    %159 = vector.broadcast %158 : vector<1x1x32xf32> to vector<4x4x32xf32>
    %160 = arith.mulf %157, %159 : vector<4x4x32xf32>
    %161 = arith.addf %154, %160 : vector<4x4x32xf32>
    %c1_95 = arith.constant 1 : index
    %c2_96 = arith.constant 2 : index
    %c1_97 = arith.constant 1 : index
    %c0_98 = arith.constant 0 : index
    %162 = vector.load %arg2[%c1_95, %c2_96, %c1_97, %c0_98] : memref<3x3x3x32xf32, #tpu.memory_space<vmem>>, vector<1x1x1x32xf32>
    %163 = vector.shape_cast %162 : vector<1x1x1x32xf32> to vector<1x32xf32>
    %164 = vector.extract_strided_slice %3 {offsets = [2, 0, 0], sizes = [4, 4, 32], strides = [1, 1, 1]} : vector<6x4x32xf32> to vector<4x4x32xf32>
    %165 = vector.shape_cast %163 : vector<1x32xf32> to vector<1x1x32xf32>
    %166 = vector.broadcast %165 : vector<1x1x32xf32> to vector<4x4x32xf32>
    %167 = arith.mulf %164, %166 : vector<4x4x32xf32>
    %168 = arith.addf %161, %167 : vector<4x4x32xf32>
    %c1_99 = arith.constant 1 : index
    %c2_100 = arith.constant 2 : index
    %c2_101 = arith.constant 2 : index
    %c0_102 = arith.constant 0 : index
    %169 = vector.load %arg2[%c1_99, %c2_100, %c2_101, %c0_102] : memref<3x3x3x32xf32, #tpu.memory_space<vmem>>, vector<1x1x1x32xf32>
    %170 = vector.shape_cast %169 : vector<1x1x1x32xf32> to vector<1x32xf32>
    %171 = vector.extract_strided_slice %4 {offsets = [2, 0, 0], sizes = [4, 4, 32], strides = [1, 1, 1]} : vector<6x4x32xf32> to vector<4x4x32xf32>
    %172 = vector.shape_cast %170 : vector<1x32xf32> to vector<1x1x32xf32>
    %173 = vector.broadcast %172 : vector<1x1x32xf32> to vector<4x4x32xf32>
    %174 = arith.mulf %171, %173 : vector<4x4x32xf32>
    %175 = arith.addf %168, %174 : vector<4x4x32xf32>
    %c1_103 = arith.constant 1 : index
    %c0_104 = arith.constant 0 : index
    %c0_105 = arith.constant 0 : index
    %176 = vector.load %arg3[%c1_103, %c0_104, %c0_105] : memref<3x1x32xf32, #tpu.memory_space<vmem>>, vector<1x1x32xf32>
    %177 = vector.shape_cast %176 : vector<1x1x32xf32> to vector<1x32xf32>
    %178 = vector.shape_cast %177 : vector<1x32xf32> to vector<1x1x32xf32>
    %179 = vector.broadcast %178 : vector<1x1x32xf32> to vector<4x4x32xf32>
    %180 = arith.addf %175, %179 : vector<4x4x32xf32>
    %cst_106 = arith.constant 0.000000e+00 : f32
    %181 = vector.broadcast %cst_106 : f32 to vector<4x4x32xf32>
    %182 = arith.maximumf %180, %181 : vector<4x4x32xf32>
    %c1_107 = arith.constant 1 : index
    %c0_108 = arith.constant 0 : index
    %c0_109 = arith.constant 0 : index
    %183 = vector.load %arg4[%c1_107, %c0_108, %c0_109] : memref<3x32x64xf32, #tpu.memory_space<vmem>>, vector<1x32x64xf32>
    %184 = vector.shape_cast %183 : vector<1x32x64xf32> to vector<32x64xf32>
    %c1_110 = arith.constant 1 : index
    %c0_111 = arith.constant 0 : index
    %c0_112 = arith.constant 0 : index
    %185 = vector.load %arg5[%c1_110, %c0_111, %c0_112] : memref<3x1x64xf32, #tpu.memory_space<vmem>>, vector<1x1x64xf32>
    %186 = vector.shape_cast %185 : vector<1x1x64xf32> to vector<1x64xf32>
    %187 = vector.extract_strided_slice %182 {offsets = [0, 0, 0], sizes = [1, 4, 32], strides = [1, 1, 1]} : vector<4x4x32xf32> to vector<1x4x32xf32>
    %188 = vector.shape_cast %187 : vector<1x4x32xf32> to vector<4x32xf32>
    %cst_113 = arith.constant dense<0.000000e+00> : vector<4x64xf32>
    %189 = tpu.matmul %188, %184, %cst_113 {dimension_numbers = #tpu.dot_dimension_numbers<[1], [0], [0], [1], [0, 0, 1, 1], [], []>} : vector<4x32xf32>, vector<32x64xf32>, vector<4x64xf32> -> vector<4x64xf32>
    %190 = vector.broadcast %186 : vector<1x64xf32> to vector<4x64xf32>
    %191 = arith.addf %189, %190 : vector<4x64xf32>
    %c0_114 = arith.constant 0 : index
    %c0_115 = arith.constant 0 : index
    %c0_116 = arith.constant 0 : index
    %c0_117 = arith.constant 0 : index
    %192 = vector.load %arg7[%c0_114, %c0_115, %c0_116, %c0_117] : memref<1x4x4x64xf32, #tpu.memory_space<vmem>>, vector<1x1x4x64xf32>
    %193 = vector.shape_cast %192 : vector<1x1x4x64xf32> to vector<4x64xf32>
    %194 = vector.shape_cast %191 : vector<4x64xf32> to vector<1x1x4x64xf32>
    tpu.vector_store %arg7[%c0_114, %c0_115, %c0_116, %c0_117], %194 {strides = array<i32>} : memref<1x4x4x64xf32, #tpu.memory_space<vmem>>, vector<1x1x4x64xf32>,
    %195 = vector.extract_strided_slice %182 {offsets = [1, 0, 0], sizes = [1, 4, 32], strides = [1, 1, 1]} : vector<4x4x32xf32> to vector<1x4x32xf32>
    %196 = vector.shape_cast %195 : vector<1x4x32xf32> to vector<4x32xf32>
    %cst_118 = arith.constant dense<0.000000e+00> : vector<4x64xf32>
    %197 = tpu.matmul %196, %184, %cst_118 {dimension_numbers = #tpu.dot_dimension_numbers<[1], [0], [0], [1], [0, 0, 1, 1], [], []>} : vector<4x32xf32>, vector<32x64xf32>, vector<4x64xf32> -> vector<4x64xf32>
    %198 = vector.broadcast %186 : vector<1x64xf32> to vector<4x64xf32>
    %199 = arith.addf %197, %198 : vector<4x64xf32>
    %c0_119 = arith.constant 0 : index
    %c1_120 = arith.constant 1 : index
    %c0_121 = arith.constant 0 : index
    %c0_122 = arith.constant 0 : index
    %200 = vector.load %arg7[%c0_119, %c1_120, %c0_121, %c0_122] : memref<1x4x4x64xf32, #tpu.memory_space<vmem>>, vector<1x1x4x64xf32>
    %201 = vector.shape_cast %200 : vector<1x1x4x64xf32> to vector<4x64xf32>
    %202 = vector.shape_cast %199 : vector<4x64xf32> to vector<1x1x4x64xf32>
    tpu.vector_store %arg7[%c0_119, %c1_120, %c0_121, %c0_122], %202 {strides = array<i32>} : memref<1x4x4x64xf32, #tpu.memory_space<vmem>>, vector<1x1x4x64xf32>,
    %203 = vector.extract_strided_slice %182 {offsets = [2, 0, 0], sizes = [1, 4, 32], strides = [1, 1, 1]} : vector<4x4x32xf32> to vector<1x4x32xf32>
    %204 = vector.shape_cast %203 : vector<1x4x32xf32> to vector<4x32xf32>
    %cst_123 = arith.constant dense<0.000000e+00> : vector<4x64xf32>
    %205 = tpu.matmul %204, %184, %cst_123 {dimension_numbers = #tpu.dot_dimension_numbers<[1], [0], [0], [1], [0, 0, 1, 1], [], []>} : vector<4x32xf32>, vector<32x64xf32>, vector<4x64xf32> -> vector<4x64xf32>
    %206 = vector.broadcast %186 : vector<1x64xf32> to vector<4x64xf32>
    %207 = arith.addf %205, %206 : vector<4x64xf32>
    %c0_124 = arith.constant 0 : index
    %c2_125 = arith.constant 2 : index
    %c0_126 = arith.constant 0 : index
    %c0_127 = arith.constant 0 : index
    %208 = vector.load %arg7[%c0_124, %c2_125, %c0_126, %c0_127] : memref<1x4x4x64xf32, #tpu.memory_space<vmem>>, vector<1x1x4x64xf32>
    %209 = vector.shape_cast %208 : vector<1x1x4x64xf32> to vector<4x64xf32>
    %210 = vector.shape_cast %207 : vector<4x64xf32> to vector<1x1x4x64xf32>
    tpu.vector_store %arg7[%c0_124, %c2_125, %c0_126, %c0_127], %210 {strides = array<i32>} : memref<1x4x4x64xf32, #tpu.memory_space<vmem>>, vector<1x1x4x64xf32>,
    %211 = vector.extract_strided_slice %182 {offsets = [3, 0, 0], sizes = [1, 4, 32], strides = [1, 1, 1]} : vector<4x4x32xf32> to vector<1x4x32xf32>
    %212 = vector.shape_cast %211 : vector<1x4x32xf32> to vector<4x32xf32>
    %cst_128 = arith.constant dense<0.000000e+00> : vector<4x64xf32>
    %213 = tpu.matmul %212, %184, %cst_128 {dimension_numbers = #tpu.dot_dimension_numbers<[1], [0], [0], [1], [0, 0, 1, 1], [], []>} : vector<4x32xf32>, vector<32x64xf32>, vector<4x64xf32> -> vector<4x64xf32>
    %214 = vector.broadcast %186 : vector<1x64xf32> to vector<4x64xf32>
    %215 = arith.addf %213, %214 : vector<4x64xf32>
    %c0_129 = arith.constant 0 : index
    %c3_130 = arith.constant 3 : index
    %c0_131 = arith.constant 0 : index
    %c0_132 = arith.constant 0 : index
    %216 = vector.load %arg7[%c0_129, %c3_130, %c0_131, %c0_132] : memref<1x4x4x64xf32, #tpu.memory_space<vmem>>, vector<1x1x4x64xf32>
    %217 = vector.shape_cast %216 : vector<1x1x4x64xf32> to vector<4x64xf32>
    %218 = vector.shape_cast %215 : vector<4x64xf32> to vector<1x1x4x64xf32>
    tpu.vector_store %arg7[%c0_129, %c3_130, %c0_131, %c0_132], %218 {strides = array<i32>} : memref<1x4x4x64xf32, #tpu.memory_space<vmem>>, vector<1x1x4x64xf32>,
    %cst_133 = arith.constant 0.000000e+00 : f32
    %219 = vector.broadcast %cst_133 : f32 to vector<4x4x32xf32>
    %c2_134 = arith.constant 2 : index
    %c0_135 = arith.constant 0 : index
    %c0_136 = arith.constant 0 : index
    %c0_137 = arith.constant 0 : index
    %220 = vector.load %arg2[%c2_134, %c0_135, %c0_136, %c0_137] : memref<3x3x3x32xf32, #tpu.memory_space<vmem>>, vector<1x1x1x32xf32>
    %221 = vector.shape_cast %220 : vector<1x1x1x32xf32> to vector<1x32xf32>
    %222 = vector.extract_strided_slice %2 {offsets = [0, 0, 0], sizes = [4, 4, 32], strides = [1, 1, 1]} : vector<6x4x32xf32> to vector<4x4x32xf32>
    %223 = vector.shape_cast %221 : vector<1x32xf32> to vector<1x1x32xf32>
    %224 = vector.broadcast %223 : vector<1x1x32xf32> to vector<4x4x32xf32>
    %225 = arith.mulf %222, %224 : vector<4x4x32xf32>
    %226 = arith.addf %219, %225 : vector<4x4x32xf32>
    %c2_138 = arith.constant 2 : index
    %c0_139 = arith.constant 0 : index
    %c1_140 = arith.constant 1 : index
    %c0_141 = arith.constant 0 : index
    %227 = vector.load %arg2[%c2_138, %c0_139, %c1_140, %c0_141] : memref<3x3x3x32xf32, #tpu.memory_space<vmem>>, vector<1x1x1x32xf32>
    %228 = vector.shape_cast %227 : vector<1x1x1x32xf32> to vector<1x32xf32>
    %229 = vector.extract_strided_slice %3 {offsets = [0, 0, 0], sizes = [4, 4, 32], strides = [1, 1, 1]} : vector<6x4x32xf32> to vector<4x4x32xf32>
    %230 = vector.shape_cast %228 : vector<1x32xf32> to vector<1x1x32xf32>
    %231 = vector.broadcast %230 : vector<1x1x32xf32> to vector<4x4x32xf32>
    %232 = arith.mulf %229, %231 : vector<4x4x32xf32>
    %233 = arith.addf %226, %232 : vector<4x4x32xf32>
    %c2_142 = arith.constant 2 : index
    %c0_143 = arith.constant 0 : index
    %c2_144 = arith.constant 2 : index
    %c0_145 = arith.constant 0 : index
    %234 = vector.load %arg2[%c2_142, %c0_143, %c2_144, %c0_145] : memref<3x3x3x32xf32, #tpu.memory_space<vmem>>, vector<1x1x1x32xf32>
    %235 = vector.shape_cast %234 : vector<1x1x1x32xf32> to vector<1x32xf32>
    %236 = vector.extract_strided_slice %4 {offsets = [0, 0, 0], sizes = [4, 4, 32], strides = [1, 1, 1]} : vector<6x4x32xf32> to vector<4x4x32xf32>
    %237 = vector.shape_cast %235 : vector<1x32xf32> to vector<1x1x32xf32>
    %238 = vector.broadcast %237 : vector<1x1x32xf32> to vector<4x4x32xf32>
    %239 = arith.mulf %236, %238 : vector<4x4x32xf32>
    %240 = arith.addf %233, %239 : vector<4x4x32xf32>
    %c2_146 = arith.constant 2 : index
    %c1_147 = arith.constant 1 : index
    %c0_148 = arith.constant 0 : index
    %c0_149 = arith.constant 0 : index
    %241 = vector.load %arg2[%c2_146, %c1_147, %c0_148, %c0_149] : memref<3x3x3x32xf32, #tpu.memory_space<vmem>>, vector<1x1x1x32xf32>
    %242 = vector.shape_cast %241 : vector<1x1x1x32xf32> to vector<1x32xf32>
    %243 = vector.extract_strided_slice %2 {offsets = [1, 0, 0], sizes = [4, 4, 32], strides = [1, 1, 1]} : vector<6x4x32xf32> to vector<4x4x32xf32>
    %244 = vector.shape_cast %242 : vector<1x32xf32> to vector<1x1x32xf32>
    %245 = vector.broadcast %244 : vector<1x1x32xf32> to vector<4x4x32xf32>
    %246 = arith.mulf %243, %245 : vector<4x4x32xf32>
    %247 = arith.addf %240, %246 : vector<4x4x32xf32>
    %c2_150 = arith.constant 2 : index
    %c1_151 = arith.constant 1 : index
    %c1_152 = arith.constant 1 : index
    %c0_153 = arith.constant 0 : index
    %248 = vector.load %arg2[%c2_150, %c1_151, %c1_152, %c0_153] : memref<3x3x3x32xf32, #tpu.memory_space<vmem>>, vector<1x1x1x32xf32>
    %249 = vector.shape_cast %248 : vector<1x1x1x32xf32> to vector<1x32xf32>
    %250 = vector.extract_strided_slice %3 {offsets = [1, 0, 0], sizes = [4, 4, 32], strides = [1, 1, 1]} : vector<6x4x32xf32> to vector<4x4x32xf32>
    %251 = vector.shape_cast %249 : vector<1x32xf32> to vector<1x1x32xf32>
    %252 = vector.broadcast %251 : vector<1x1x32xf32> to vector<4x4x32xf32>
    %253 = arith.mulf %250, %252 : vector<4x4x32xf32>
    %254 = arith.addf %247, %253 : vector<4x4x32xf32>
    %c2_154 = arith.constant 2 : index
    %c1_155 = arith.constant 1 : index
    %c2_156 = arith.constant 2 : index
    %c0_157 = arith.constant 0 : index
    %255 = vector.load %arg2[%c2_154, %c1_155, %c2_156, %c0_157] : memref<3x3x3x32xf32, #tpu.memory_space<vmem>>, vector<1x1x1x32xf32>
    %256 = vector.shape_cast %255 : vector<1x1x1x32xf32> to vector<1x32xf32>
    %257 = vector.extract_strided_slice %4 {offsets = [1, 0, 0], sizes = [4, 4, 32], strides = [1, 1, 1]} : vector<6x4x32xf32> to vector<4x4x32xf32>
    %258 = vector.shape_cast %256 : vector<1x32xf32> to vector<1x1x32xf32>
    %259 = vector.broadcast %258 : vector<1x1x32xf32> to vector<4x4x32xf32>
    %260 = arith.mulf %257, %259 : vector<4x4x32xf32>
    %261 = arith.addf %254, %260 : vector<4x4x32xf32>
    %c2_158 = arith.constant 2 : index
    %c2_159 = arith.constant 2 : index
    %c0_160 = arith.constant 0 : index
    %c0_161 = arith.constant 0 : index
    %262 = vector.load %arg2[%c2_158, %c2_159, %c0_160, %c0_161] : memref<3x3x3x32xf32, #tpu.memory_space<vmem>>, vector<1x1x1x32xf32>
    %263 = vector.shape_cast %262 : vector<1x1x1x32xf32> to vector<1x32xf32>
    %264 = vector.extract_strided_slice %2 {offsets = [2, 0, 0], sizes = [4, 4, 32], strides = [1, 1, 1]} : vector<6x4x32xf32> to vector<4x4x32xf32>
    %265 = vector.shape_cast %263 : vector<1x32xf32> to vector<1x1x32xf32>
    %266 = vector.broadcast %265 : vector<1x1x32xf32> to vector<4x4x32xf32>
    %267 = arith.mulf %264, %266 : vector<4x4x32xf32>
    %268 = arith.addf %261, %267 : vector<4x4x32xf32>
    %c2_162 = arith.constant 2 : index
    %c2_163 = arith.constant 2 : index
    %c1_164 = arith.constant 1 : index
    %c0_165 = arith.constant 0 : index
    %269 = vector.load %arg2[%c2_162, %c2_163, %c1_164, %c0_165] : memref<3x3x3x32xf32, #tpu.memory_space<vmem>>, vector<1x1x1x32xf32>
    %270 = vector.shape_cast %269 : vector<1x1x1x32xf32> to vector<1x32xf32>
    %271 = vector.extract_strided_slice %3 {offsets = [2, 0, 0], sizes = [4, 4, 32], strides = [1, 1, 1]} : vector<6x4x32xf32> to vector<4x4x32xf32>
    %272 = vector.shape_cast %270 : vector<1x32xf32> to vector<1x1x32xf32>
    %273 = vector.broadcast %272 : vector<1x1x32xf32> to vector<4x4x32xf32>
    %274 = arith.mulf %271, %273 : vector<4x4x32xf32>
    %275 = arith.addf %268, %274 : vector<4x4x32xf32>
    %c2_166 = arith.constant 2 : index
    %c2_167 = arith.constant 2 : index
    %c2_168 = arith.constant 2 : index
    %c0_169 = arith.constant 0 : index
    %276 = vector.load %arg2[%c2_166, %c2_167, %c2_168, %c0_169] : memref<3x3x3x32xf32, #tpu.memory_space<vmem>>, vector<1x1x1x32xf32>
    %277 = vector.shape_cast %276 : vector<1x1x1x32xf32> to vector<1x32xf32>
    %278 = vector.extract_strided_slice %4 {offsets = [2, 0, 0], sizes = [4, 4, 32], strides = [1, 1, 1]} : vector<6x4x32xf32> to vector<4x4x32xf32>
    %279 = vector.shape_cast %277 : vector<1x32xf32> to vector<1x1x32xf32>
    %280 = vector.broadcast %279 : vector<1x1x32xf32> to vector<4x4x32xf32>
    %281 = arith.mulf %278, %280 : vector<4x4x32xf32>
    %282 = arith.addf %275, %281 : vector<4x4x32xf32>
    %c2_170 = arith.constant 2 : index
    %c0_171 = arith.constant 0 : index
    %c0_172 = arith.constant 0 : index
    %283 = vector.load %arg3[%c2_170, %c0_171, %c0_172] : memref<3x1x32xf32, #tpu.memory_space<vmem>>, vector<1x1x32xf32>
    %284 = vector.shape_cast %283 : vector<1x1x32xf32> to vector<1x32xf32>
    %285 = vector.shape_cast %284 : vector<1x32xf32> to vector<1x1x32xf32>
    %286 = vector.broadcast %285 : vector<1x1x32xf32> to vector<4x4x32xf32>
    %287 = arith.addf %282, %286 : vector<4x4x32xf32>
    %cst_173 = arith.constant 0.000000e+00 : f32
    %288 = vector.broadcast %cst_173 : f32 to vector<4x4x32xf32>
    %289 = arith.maximumf %287, %288 : vector<4x4x32xf32>
    %c2_174 = arith.constant 2 : index
    %c0_175 = arith.constant 0 : index
    %c0_176 = arith.constant 0 : index
    %290 = vector.load %arg4[%c2_174, %c0_175, %c0_176] : memref<3x32x64xf32, #tpu.memory_space<vmem>>, vector<1x32x64xf32>
    %291 = vector.shape_cast %290 : vector<1x32x64xf32> to vector<32x64xf32>
    %c2_177 = arith.constant 2 : index
    %c0_178 = arith.constant 0 : index
    %c0_179 = arith.constant 0 : index
    %292 = vector.load %arg5[%c2_177, %c0_178, %c0_179] : memref<3x1x64xf32, #tpu.memory_space<vmem>>, vector<1x1x64xf32>
    %293 = vector.shape_cast %292 : vector<1x1x64xf32> to vector<1x64xf32>
    %294 = vector.extract_strided_slice %289 {offsets = [0, 0, 0], sizes = [1, 4, 32], strides = [1, 1, 1]} : vector<4x4x32xf32> to vector<1x4x32xf32>
    %295 = vector.shape_cast %294 : vector<1x4x32xf32> to vector<4x32xf32>
    %cst_180 = arith.constant dense<0.000000e+00> : vector<4x64xf32>
    %296 = tpu.matmul %295, %291, %cst_180 {dimension_numbers = #tpu.dot_dimension_numbers<[1], [0], [0], [1], [0, 0, 1, 1], [], []>} : vector<4x32xf32>, vector<32x64xf32>, vector<4x64xf32> -> vector<4x64xf32>
    %297 = vector.broadcast %293 : vector<1x64xf32> to vector<4x64xf32>
    %298 = arith.addf %296, %297 : vector<4x64xf32>
    %c0_181 = arith.constant 0 : index
    %c0_182 = arith.constant 0 : index
    %c0_183 = arith.constant 0 : index
    %c0_184 = arith.constant 0 : index
    %299 = vector.load %arg8[%c0_181, %c0_182, %c0_183, %c0_184] : memref<1x4x4x64xf32, #tpu.memory_space<vmem>>, vector<1x1x4x64xf32>
    %300 = vector.shape_cast %299 : vector<1x1x4x64xf32> to vector<4x64xf32>
    %301 = vector.shape_cast %298 : vector<4x64xf32> to vector<1x1x4x64xf32>
    tpu.vector_store %arg8[%c0_181, %c0_182, %c0_183, %c0_184], %301 {strides = array<i32>} : memref<1x4x4x64xf32, #tpu.memory_space<vmem>>, vector<1x1x4x64xf32>,
    %302 = vector.extract_strided_slice %289 {offsets = [1, 0, 0], sizes = [1, 4, 32], strides = [1, 1, 1]} : vector<4x4x32xf32> to vector<1x4x32xf32>
    %303 = vector.shape_cast %302 : vector<1x4x32xf32> to vector<4x32xf32>
    %cst_185 = arith.constant dense<0.000000e+00> : vector<4x64xf32>
    %304 = tpu.matmul %303, %291, %cst_185 {dimension_numbers = #tpu.dot_dimension_numbers<[1], [0], [0], [1], [0, 0, 1, 1], [], []>} : vector<4x32xf32>, vector<32x64xf32>, vector<4x64xf32> -> vector<4x64xf32>
    %305 = vector.broadcast %293 : vector<1x64xf32> to vector<4x64xf32>
    %306 = arith.addf %304, %305 : vector<4x64xf32>
    %c0_186 = arith.constant 0 : index
    %c1_187 = arith.constant 1 : index
    %c0_188 = arith.constant 0 : index
    %c0_189 = arith.constant 0 : index
    %307 = vector.load %arg8[%c0_186, %c1_187, %c0_188, %c0_189] : memref<1x4x4x64xf32, #tpu.memory_space<vmem>>, vector<1x1x4x64xf32>
    %308 = vector.shape_cast %307 : vector<1x1x4x64xf32> to vector<4x64xf32>
    %309 = vector.shape_cast %306 : vector<4x64xf32> to vector<1x1x4x64xf32>
    tpu.vector_store %arg8[%c0_186, %c1_187, %c0_188, %c0_189], %309 {strides = array<i32>} : memref<1x4x4x64xf32, #tpu.memory_space<vmem>>, vector<1x1x4x64xf32>,
    %310 = vector.extract_strided_slice %289 {offsets = [2, 0, 0], sizes = [1, 4, 32], strides = [1, 1, 1]} : vector<4x4x32xf32> to vector<1x4x32xf32>
    %311 = vector.shape_cast %310 : vector<1x4x32xf32> to vector<4x32xf32>
    %cst_190 = arith.constant dense<0.000000e+00> : vector<4x64xf32>
    %312 = tpu.matmul %311, %291, %cst_190 {dimension_numbers = #tpu.dot_dimension_numbers<[1], [0], [0], [1], [0, 0, 1, 1], [], []>} : vector<4x32xf32>, vector<32x64xf32>, vector<4x64xf32> -> vector<4x64xf32>
    %313 = vector.broadcast %293 : vector<1x64xf32> to vector<4x64xf32>
    %314 = arith.addf %312, %313 : vector<4x64xf32>
    %c0_191 = arith.constant 0 : index
    %c2_192 = arith.constant 2 : index
    %c0_193 = arith.constant 0 : index
    %c0_194 = arith.constant 0 : index
    %315 = vector.load %arg8[%c0_191, %c2_192, %c0_193, %c0_194] : memref<1x4x4x64xf32, #tpu.memory_space<vmem>>, vector<1x1x4x64xf32>
    %316 = vector.shape_cast %315 : vector<1x1x4x64xf32> to vector<4x64xf32>
    %317 = vector.shape_cast %314 : vector<4x64xf32> to vector<1x1x4x64xf32>
    tpu.vector_store %arg8[%c0_191, %c2_192, %c0_193, %c0_194], %317 {strides = array<i32>} : memref<1x4x4x64xf32, #tpu.memory_space<vmem>>, vector<1x1x4x64xf32>,
    %318 = vector.extract_strided_slice %289 {offsets = [3, 0, 0], sizes = [1, 4, 32], strides = [1, 1, 1]} : vector<4x4x32xf32> to vector<1x4x32xf32>
    %319 = vector.shape_cast %318 : vector<1x4x32xf32> to vector<4x32xf32>
    %cst_195 = arith.constant dense<0.000000e+00> : vector<4x64xf32>
    %320 = tpu.matmul %319, %291, %cst_195 {dimension_numbers = #tpu.dot_dimension_numbers<[1], [0], [0], [1], [0, 0, 1, 1], [], []>} : vector<4x32xf32>, vector<32x64xf32>, vector<4x64xf32> -> vector<4x64xf32>
    %321 = vector.broadcast %293 : vector<1x64xf32> to vector<4x64xf32>
    %322 = arith.addf %320, %321 : vector<4x64xf32>
    %c0_196 = arith.constant 0 : index
    %c3_197 = arith.constant 3 : index
    %c0_198 = arith.constant 0 : index
    %c0_199 = arith.constant 0 : index
    %323 = vector.load %arg8[%c0_196, %c3_197, %c0_198, %c0_199] : memref<1x4x4x64xf32, #tpu.memory_space<vmem>>, vector<1x1x4x64xf32>
    %324 = vector.shape_cast %323 : vector<1x1x4x64xf32> to vector<4x64xf32>
    %325 = vector.shape_cast %322 : vector<4x64xf32> to vector<1x1x4x64xf32>
    tpu.vector_store %arg8[%c0_196, %c3_197, %c0_198, %c0_199], %325 {strides = array<i32>} : memref<1x4x4x64xf32, #tpu.memory_space<vmem>>, vector<1x1x4x64xf32>,
    return
  }
  func.func @transform_0(%arg0: i32) -> (i32, i32, i32, i32) {
    %c0_i32 = arith.constant 0 : i32
    %c0_i32_0 = arith.constant 0 : i32
    %c0_i32_1 = arith.constant 0 : i32
    %c0_i32_2 = arith.constant 0 : i32
    return %arg0, %c0_i32, %c0_i32_0, %c0_i32_1 : i32, i32, i32, i32
  }
  func.func @transform_1(%arg0: i32) -> (i32, i32, i32, i32) {
    %c0_i32 = arith.constant 0 : i32
    %c0_i32_0 = arith.constant 0 : i32
    %c0_i32_1 = arith.constant 0 : i32
    %c0_i32_2 = arith.constant 0 : i32
    %c0_i32_3 = arith.constant 0 : i32
    return %c0_i32, %c0_i32_0, %c0_i32_1, %c0_i32_2 : i32, i32, i32, i32
  }
  func.func @transform_2(%arg0: i32) -> (i32, i32, i32) {
    %c0_i32 = arith.constant 0 : i32
    %c0_i32_0 = arith.constant 0 : i32
    %c0_i32_1 = arith.constant 0 : i32
    %c0_i32_2 = arith.constant 0 : i32
    return %c0_i32, %c0_i32_0, %c0_i32_1 : i32, i32, i32
  }
  func.func @transform_3(%arg0: i32) -> (i32, i32, i32) {
    %c0_i32 = arith.constant 0 : i32
    %c0_i32_0 = arith.constant 0 : i32
    %c0_i32_1 = arith.constant 0 : i32
    %c0_i32_2 = arith.constant 0 : i32
    return %c0_i32, %c0_i32_0, %c0_i32_1 : i32, i32, i32
  }
  func.func @transform_4(%arg0: i32) -> (i32, i32, i32) {
    %c0_i32 = arith.constant 0 : i32
    %c0_i32_0 = arith.constant 0 : i32
    %c0_i32_1 = arith.constant 0 : i32
    %c0_i32_2 = arith.constant 0 : i32
    return %c0_i32, %c0_i32_0, %c0_i32_1 : i32, i32, i32
  }
  func.func @transform_5(%arg0: i32) -> (i32, i32, i32, i32) {
    %c0_i32 = arith.constant 0 : i32
    %c0_i32_0 = arith.constant 0 : i32
    %c0_i32_1 = arith.constant 0 : i32
    %c0_i32_2 = arith.constant 0 : i32
    return %arg0, %c0_i32, %c0_i32_0, %c0_i32_1 : i32, i32, i32, i32
  }
  func.func @transform_6(%arg0: i32) -> (i32, i32, i32, i32) {
    %c0_i32 = arith.constant 0 : i32
    %c0_i32_0 = arith.constant 0 : i32
    %c0_i32_1 = arith.constant 0 : i32
    %c0_i32_2 = arith.constant 0 : i32
    return %arg0, %c0_i32, %c0_i32_0, %c0_i32_1 : i32, i32, i32, i32
  }
  func.func @transform_7(%arg0: i32) -> (i32, i32, i32, i32) {
    %c0_i32 = arith.constant 0 : i32
    %c0_i32_0 = arith.constant 0 : i32
    %c0_i32_1 = arith.constant 0 : i32
    %c0_i32_2 = arith.constant 0 : i32
    return %arg0, %c0_i32, %c0_i32_0, %c0_i32_1 : i32, i32, i32, i32
  }
}

</mosaic_0001>

<llo_original>
// kernel: conv_projection_forward.1
$region0: #{conv_projection_forward.1}
  #allocation0 [shape = 'u32[]', space=smem, size = 0x4, offset = 0x4, fixed_abs, tag = 'smem constant byte address 0x4 - core index']
  #allocation1 [shape = 'u32[144,128]{1,0:T(1,128)}', space=vmem, size = 0x12000, scoped, tag = 'internal scratch']
  %s0 = inlined_call_operand.vmem [shape: f32[2,6,6,32], index: 0, kind: input, shape index: {}]
  %s1 = inlined_call_operand.vmem [shape: f32[3,3,3,32], index: 1, kind: input, shape index: {}]
  %s2 = inlined_call_operand.vmem [shape: f32[3,1,32], index: 2, kind: input, shape index: {}]
  %s3 = inlined_call_operand.vmem [shape: f32[3,32,64], index: 3, kind: input, shape index: {}]
  %s4 = inlined_call_operand.vmem [shape: f32[3,1,64], index: 4, kind: input, shape index: {}]
  %s5 = inlined_call_operand.vmem [shape: f32[2,4,4,64], index: 5, kind: output, shape index: {0}]
  %s6 = inlined_call_operand.vmem [shape: f32[2,4,4,64], index: 6, kind: output, shape index: {1}]
  %s7 = inlined_call_operand.vmem [shape: f32[2,4,4,64], index: 7, kind: output, shape index: {2}]
  %8 = xla_tuple %s5, %s6, %s7
  %s9 = sld [smem:[#allocation0]]
  $region69: #{conv_projection_forward.1} parent=0
    _
  %s11 = ssub.s32 1, %s9
  %s12 = scalar_select 0, %s11, %s9
  loop: start=0, step=1, limit=4
  $region2: #{conv_projection_forward.1} parent=0 // loop_pre_header
    _
  $region3: #{conv_projection_forward.1} parent=0 // loop_header
    %s14 = sphi 0, %s18
    %p15 = scmp.ge.s32.totalorder %s14, 4
    %s24 = sphi 0, %s26
    %s27 = sphi 0, %s24
    %s28 = sphi 0, %s27
    %s44 = sphi 0, %s28
    %s48 = sphi 0, %s48
    %s50 = sphi 0, %s48
    %s51 = sphi 0, %s50
    %s65 = sphi 0, %s51
    %s69 = sphi 0, %s69
    %s71 = sphi 0, %s69
    %s72 = sphi 0, %s71
    %s86 = sphi 0, %s72
    %s90 = sphi 0, %s90
    %s92 = sphi 0, %s90
    %s93 = sphi 0, %s92
    %s107 = sphi 0, %s93
    %s111 = sphi 0, %s111
    %s113 = sphi 0, %s111
    %s114 = sphi 0, %s113
    %s128 = sphi 0, %s114
    %s134 = sphi 0, %s136
    %s137 = sphi 0, %s134
    %s138 = sphi 0, %s137
    %s154 = sphi 0, %s138
    %s160 = sphi 0, %s162
    %s163 = sphi 0, %s160
    %s164 = sphi 0, %s163
    %s180 = sphi 0, %s164
    %s186 = sphi 0, %s188
    %s189 = sphi 0, %s186
    %s190 = sphi 0, %s189
    %s206 = sphi 0, %s190
  $region4: #{conv_projection_forward.1} parent=0 // loop_header_branch
    %17 = sbr.rel (%p15) target = $region8
  $region5: #{conv_projection_forward.1} parent=0 // loop_body
    %s19 = ssub.s32 %s14, 1
    %s20 = ssub.s32 %s14, 2
    %s21 = sadd.s32 %s14, 1
    %s22 = ssub.s32 %s14, %s21
    %p23 = scmp.eq.s32.totalorder %s22, 0
    %s25 = sadd.s32 %s24, 1
    %s26 = scalar_select %p23, %s24, %s25
    %p29 = pneg %p23
    %p30 = scmp.eq.s32.totalorder %s14, 1
    %p31 = por %p29, %p30
    %p32 = scmp.ne.s32.totalorder %s24, %s27
    %p33 = scmp.eq.s32.totalorder %s14, 0
    %p34 = por %p32, %p33
    %p35 = scmp.ne.s32.totalorder %s24, %s27
    %p36 = scmp.eq.s32.totalorder %s19, 1
    %p37 = por %p35, %p36
    %p38 = scmp.ne.s32.totalorder %s27, %s28
    %p39 = scmp.eq.s32.totalorder %s19, 0
    %p40 = por %p38, %p39
    %p41 = scmp.ne.s32.totalorder %s27, %s28
    %p42 = scmp.eq.s32.totalorder %s20, 1
    %p43 = por %p41, %p42
    %p45 = scmp.ne.s32.totalorder %s28, %s44
    %p46 = scmp.eq.s32.totalorder %s20, 0
    %p47 = por %p45, %p46
    %s49 = sadd.s32 %s48, 1
    %p52 = scmp.eq.s32.totalorder %s14, 1
    %p53 = scmp.ne.s32.totalorder %s48, %s50
    %p54 = scmp.eq.s32.totalorder %s14, 0
    %p55 = por %p53, %p54
    %p56 = scmp.ne.s32.totalorder %s48, %s50
    %p57 = scmp.eq.s32.totalorder %s19, 1
    %p58 = por %p56, %p57
    %p59 = scmp.ne.s32.totalorder %s50, %s51
    %p60 = scmp.eq.s32.totalorder %s19, 0
    %p61 = por %p59, %p60
    %p62 = scmp.ne.s32.totalorder %s50, %s51
    %p63 = scmp.eq.s32.totalorder %s20, 1
    %p64 = por %p62, %p63
    %p66 = scmp.ne.s32.totalorder %s51, %s65
    %p67 = scmp.eq.s32.totalorder %s20, 0
    %p68 = por %p66, %p67
    %s70 = sadd.s32 %s69, 1
    %p73 = scmp.eq.s32.totalorder %s14, 1
    %p74 = scmp.ne.s32.totalorder %s69, %s71
    %p75 = scmp.eq.s32.totalorder %s14, 0
    %p76 = por %p74, %p75
    %p77 = scmp.ne.s32.totalorder %s69, %s71
    %p78 = scmp.eq.s32.totalorder %s19, 1
    %p79 = por %p77, %p78
    %p80 = scmp.ne.s32.totalorder %s71, %s72
    %p81 = scmp.eq.s32.totalorder %s19, 0
    %p82 = por %p80, %p81
    %p83 = scmp.ne.s32.totalorder %s71, %s72
    %p84 = scmp.eq.s32.totalorder %s20, 1
    %p85 = por %p83, %p84
    %p87 = scmp.ne.s32.totalorder %s72, %s86
    %p88 = scmp.eq.s32.totalorder %s20, 0
    %p89 = por %p87, %p88
    %s91 = sadd.s32 %s90, 1
    %p94 = scmp.eq.s32.totalorder %s14, 1
    %p95 = scmp.ne.s32.totalorder %s90, %s92
    %p96 = scmp.eq.s32.totalorder %s14, 0
    %p97 = por %p95, %p96
    %p98 = scmp.ne.s32.totalorder %s90, %s92
    %p99 = scmp.eq.s32.totalorder %s19, 1
    %p100 = por %p98, %p99
    %p101 = scmp.ne.s32.totalorder %s92, %s93
    %p102 = scmp.eq.s32.totalorder %s19, 0
    %p103 = por %p101, %p102
    %p104 = scmp.ne.s32.totalorder %s92, %s93
    %p105 = scmp.eq.s32.totalorder %s20, 1
    %p106 = por %p104, %p105
    %p108 = scmp.ne.s32.totalorder %s93, %s107
    %p109 = scmp.eq.s32.totalorder %s20, 0
    %p110 = por %p108, %p109
    %s112 = sadd.s32 %s111, 1
    %p115 = scmp.eq.s32.totalorder %s14, 1
    %p116 = scmp.ne.s32.totalorder %s111, %s113
    %p117 = scmp.eq.s32.totalorder %s14, 0
    %p118 = por %p116, %p117
    %p119 = scmp.ne.s32.totalorder %s111, %s113
    %p120 = scmp.eq.s32.totalorder %s19, 1
    %p121 = por %p119, %p120
    %p122 = scmp.ne.s32.totalorder %s113, %s114
    %p123 = scmp.eq.s32.totalorder %s19, 0
    %p124 = por %p122, %p123
    %p125 = scmp.ne.s32.totalorder %s113, %s114
    %p126 = scmp.eq.s32.totalorder %s20, 1
    %p127 = por %p125, %p126
    %p129 = scmp.ne.s32.totalorder %s114, %s128
    %p130 = scmp.eq.s32.totalorder %s20, 0
    %p131 = por %p129, %p130
    %s132 = ssub.s32 %s14, %s21
    %p133 = scmp.eq.s32.totalorder %s132, 0
    %s135 = sadd.s32 %s134, 1
    %s136 = scalar_select %p133, %s134, %s135
    %p139 = pneg %p133
    %p140 = scmp.eq.s32.totalorder %s14, 1
    %p141 = por %p139, %p140
    %p142 = scmp.ne.s32.totalorder %s134, %s137
    %p143 = scmp.eq.s32.totalorder %s14, 0
    %p144 = por %p142, %p143
    %p145 = scmp.ne.s32.totalorder %s134, %s137
    %p146 = scmp.eq.s32.totalorder %s19, 1
    %p147 = por %p145, %p146
    %p148 = scmp.ne.s32.totalorder %s137, %s138
    %p149 = scmp.eq.s32.totalorder %s19, 0
    %p150 = por %p148, %p149
    %p151 = scmp.ne.s32.totalorder %s137, %s138
    %p152 = scmp.eq.s32.totalorder %s20, 1
    %p153 = por %p151, %p152
    %p155 = scmp.ne.s32.totalorder %s138, %s154
    %p156 = scmp.eq.s32.totalorder %s20, 0
    %p157 = por %p155, %p156
    %s158 = ssub.s32 %s14, %s21
    %p159 = scmp.eq.s32.totalorder %s158, 0
    %s161 = sadd.s32 %s160, 1
    %s162 = scalar_select %p159, %s160, %s161
    %p165 = pneg %p159
    %p166 = scmp.eq.s32.totalorder %s14, 1
    %p167 = por %p165, %p166
    %p168 = scmp.ne.s32.totalorder %s160, %s163
    %p169 = scmp.eq.s32.totalorder %s14, 0
    %p170 = por %p168, %p169
    %p171 = scmp.ne.s32.totalorder %s160, %s163
    %p172 = scmp.eq.s32.totalorder %s19, 1
    %p173 = por %p171, %p172
    %p174 = scmp.ne.s32.totalorder %s163, %s164
    %p175 = scmp.eq.s32.totalorder %s19, 0
    %p176 = por %p174, %p175
    %p177 = scmp.ne.s32.totalorder %s163, %s164
    %p178 = scmp.eq.s32.totalorder %s20, 1
    %p179 = por %p177, %p178
    %p181 = scmp.ne.s32.totalorder %s164, %s180
    %p182 = scmp.eq.s32.totalorder %s20, 0
    %p183 = por %p181, %p182
    %s184 = ssub.s32 %s14, %s21
    %p185 = scmp.eq.s32.totalorder %s184, 0
    %s187 = sadd.s32 %s186, 1
    %s188 = scalar_select %p185, %s186, %s187
    %p191 = pneg %p185
    %p192 = scmp.eq.s32.totalorder %s14, 1
    %p193 = por %p191, %p192
    %p194 = scmp.ne.s32.totalorder %s186, %s189
    %p195 = scmp.eq.s32.totalorder %s14, 0
    %p196 = por %p194, %p195
    %p197 = scmp.ne.s32.totalorder %s186, %s189
    %p198 = scmp.eq.s32.totalorder %s19, 1
    %p199 = por %p197, %p198
    %p200 = scmp.ne.s32.totalorder %s189, %s190
    %p201 = scmp.eq.s32.totalorder %s19, 0
    %p202 = por %p200, %p201
    %p203 = scmp.ne.s32.totalorder %s189, %s190
    %p204 = scmp.eq.s32.totalorder %s20, 1
    %p205 = por %p203, %p204
    %p207 = scmp.ne.s32.totalorder %s190, %s206
    %p208 = scmp.eq.s32.totalorder %s20, 0
    %p209 = por %p207, %p208
    %p210 = scmp.le.s32.totalorder 1, %s14
    %p211 = scmp.lt.s32.totalorder %s14, 3
    %p212 = pnand %p210, %p211
    %p213 = pneg %p212
    // Predicated region
    $region9: #{conv_projection_forward.1} parent=5 // pred_check
      _
    $region10: #{conv_projection_forward.1} parent=5 // pred_check_branch
      %215 = sbr.rel (%p212) target = $region12
    $region11: #{conv_projection_forward.1} parent=5 // pred_region
      %s216 = ssub.s32 %s14, 1
      // Predicated region
      $region13: #{conv_projection_forward.1} parent=11 // pred_check
        %p217 = pneg %p61
      $region14: #{conv_projection_forward.1} parent=11 // pred_check_branch
        %219 = sbr.rel (%p217) target = $region16
      $region15: #{conv_projection_forward.1} parent=11 // pred_region
        _
      $region16: #{conv_projection_forward.1} parent=11 // pred_fallthru
        _
      // Predicated region
      $region17: #{conv_projection_forward.1} parent=11 // pred_check
        %p220 = pneg %p82
      $region18: #{conv_projection_forward.1} parent=11 // pred_check_branch
        %222 = sbr.rel (%p220) target = $region20
      $region19: #{conv_projection_forward.1} parent=11 // pred_region
        _
      $region20: #{conv_projection_forward.1} parent=11 // pred_fallthru
        _
      // Predicated region
      $region21: #{conv_projection_forward.1} parent=11 // pred_check
        %p223 = pneg %p103
      $region22: #{conv_projection_forward.1} parent=11 // pred_check_branch
        %225 = sbr.rel (%p223) target = $region24
      $region23: #{conv_projection_forward.1} parent=11 // pred_region
        _
      $region24: #{conv_projection_forward.1} parent=11 // pred_fallthru
        _
      // Predicated region
      $region25: #{conv_projection_forward.1} parent=11 // pred_check
        %p226 = pneg %p124
      $region26: #{conv_projection_forward.1} parent=11 // pred_check_branch
        %228 = sbr.rel (%p226) target = $region28
      $region27: #{conv_projection_forward.1} parent=11 // pred_region
        _
      $region28: #{conv_projection_forward.1} parent=11 // pred_fallthru
        _
    $region12: #{conv_projection_forward.1} parent=5 // pred_fallthru
      _
    %p229 = scmp.lt.s32.totalorder %s14, 2
    // Predicated region
    $region29: #{conv_projection_forward.1} parent=5 // pred_check
      %p230 = pneg %p229
    $region30: #{conv_projection_forward.1} parent=5 // pred_check_branch
      %232 = sbr.rel (%p230) target = $region32
    $region31: #{conv_projection_forward.1} parent=5 // pred_region
      // Predicated region
      $region33: #{conv_projection_forward.1} parent=31 // pred_check
        %p233 = pneg %p34
      $region34: #{conv_projection_forward.1} parent=31 // pred_check_branch
        %235 = sbr.rel (%p233) target = $region36
      $region35: #{conv_projection_forward.1} parent=31 // pred_region
        %p236 = scmp.lt.s32.totalorder %s14, 1
        %s237 = scalar_select %p236, %s14, 1
        %s238 = smul.addr %s237, 6
        %s239 = smul.addr %s238, 8
        %s240 = scalar_lea.vmem %s0, %s239
      $region36: #{conv_projection_forward.1} parent=31 // pred_fallthru
        _
    $region32: #{conv_projection_forward.1} parent=5 // pred_fallthru
      _
    %p241 = scmp.le.s32.totalorder 1, %s14
    %p242 = scmp.lt.s32.totalorder %s14, 3
    %p243 = pnand %p241, %p242
    %p244 = pneg %p243
    // Predicated region
    $region37: #{conv_projection_forward.1} parent=5 // pred_check
      _
    $region38: #{conv_projection_forward.1} parent=5 // pred_check_branch
      %246 = sbr.rel (%p243) target = $region40
    $region39: #{conv_projection_forward.1} parent=5 // pred_region
      %s247 = ssub.s32 %s14, 1
      %p248 = scmp.lt.s32.totalorder %s19, 1
      %s249 = scalar_select %p248, %s19, 1
      %s250 = smul.addr %s249, 6
      %s251 = smul.addr %s250, 8
      %s252 = scalar_lea.vmem %s0, %s251
      %p253 = pneg %p40
      %p254 = pneg %p37
      %p255 = pneg %p61
      %p256 = pneg %p58
      %p257 = pneg %p82
      %p258 = pneg %p79
      %p259 = pneg %p103
      %p260 = pneg %p100
      %p261 = pneg %p124
      %p262 = pneg %p121
      %p263 = pneg %p150
      %p264 = pneg %p147
      %p265 = scmp.lt.s32.totalorder %s19, 1
      %s266 = scalar_select %p265, %s19, 1
      %s267 = smul.addr %s266, 4
      %s268 = smul.addr %s267, 4
      %s269 = scalar_lea.vmem %s5, %s268
      %p270 = pneg %p176
      %p271 = pneg %p173
      %p272 = scmp.lt.s32.totalorder %s19, 1
      %s273 = scalar_select %p272, %s19, 1
      %s274 = smul.addr %s273, 4
      %s275 = smul.addr %s274, 4
      %s276 = scalar_lea.vmem %s6, %s275
      %p277 = pneg %p202
      %p278 = pneg %p199
      %p279 = scmp.lt.s32.totalorder %s19, 1
      %s280 = scalar_select %p279, %s19, 1
      %s281 = smul.addr %s280, 4
      %s282 = smul.addr %s281, 4
      %s283 = scalar_lea.vmem %s7, %s282
      %p284 = scmp.lt.s32.totalorder %s19, 1
      %s285 = scalar_select %p284, %s19, 1
      %s286 = smul.addr %s285, 6
      %s287 = smul.addr %s286, 8
      %s288 = scalar_lea.vmem %s0, %s287
      %p289 = scmp.lt.s32.totalorder %s19, 1
      %s290 = scalar_select %p289, %s19, 1
      %s291 = smul.addr %s290, 4
      %s292 = smul.addr %s291, 4
      %s293 = scalar_lea.vmem %s5, %s292
      %p294 = scmp.lt.s32.totalorder %s19, 1
      %s295 = scalar_select %p294, %s19, 1
      %s296 = smul.addr %s295, 4
      %s297 = smul.addr %s296, 4
      %s298 = scalar_lea.vmem %s6, %s297
      %p299 = scmp.lt.s32.totalorder %s19, 1
      %s300 = scalar_select %p299, %s19, 1
      %s301 = smul.addr %s300, 4
      %s302 = smul.addr %s301, 4
      %s303 = scalar_lea.vmem %s7, %s302
      %v304 = vld [vmem:[%s288] sm:$0x3f]
      %v305 = vld [vmem:[%s288 + $0x8] sm:$0x3f]
      %v306 = vld [vmem:[%s288 + $0x10] sm:$0x3f]
      %v307 = vld [vmem:[%s288 + $0x18] sm:$0x3f]
      %v308 = vld [vmem:[%s288 + $0x20] sm:$0x3f]
      %v309 = vld [vmem:[%s288 + $0x28] sm:$0x3f]
      %v310 = vld [vmem:[%s1] sm:$0x1]
      %v311 = vlaneseq
      %v312 = vshrl.u32 %v311, 7
      %v313 = vsub.s32 0, %v312
      %v314 = vrot.slane %v310, %v313
      %v315 = vmul.f32 %v304, %v314
      %v316 = vmul.f32 %v305, %v314
      %v317 = vmul.f32 %v306, %v314
      %v318 = vmul.f32 %v307, %v314
      %v319 = vadd.f32 %v315, 0.0
      %v320 = vadd.f32 %v316, 0.0
      %v321 = vadd.f32 %v317, 0.0
      %v322 = vadd.f32 %v318, 0.0
      %v323 = vld [vmem:[%s1 + $0x1] sm:$0x1]
      %v324 = vlaneseq
      %v325 = vshrl.u32 %v324, 7
      %v326 = vsub.s32 0, %v325
      %v327 = vrot.slane %v323, %v326
      %v328 = vmul.f32 %v304, %v327
      %v329 = vmul.f32 %v305, %v327
      %v330 = vmul.f32 %v306, %v327
      %v331 = vmul.f32 %v307, %v327
      %v336 = vrot.slane %v328, 1
      %v337 = vrot.slane %v329, 1
      %v338 = vrot.slane %v330, 1
      %v339 = vrot.slane %v331, 1
      %v344 = vadd.f32 %v319, %v336
      %v345 = vadd.f32 %v320, %v337
      %v346 = vadd.f32 %v321, %v338
      %v347 = vadd.f32 %v322, %v339
      %v348 = vld [vmem:[%s1 + $0x2] sm:$0x1]
      %v349 = vlaneseq
      %v350 = vshrl.u32 %v349, 7
      %v351 = vsub.s32 0, %v350
      %v352 = vrot.slane %v348, %v351
      %v353 = vmul.f32 %v304, %v352
      %v354 = vmul.f32 %v305, %v352
      %v355 = vmul.f32 %v306, %v352
      %v356 = vmul.f32 %v307, %v352
      %v361 = vrot.slane %v353, 2
      %v362 = vrot.slane %v354, 2
      %v363 = vrot.slane %v355, 2
      %v364 = vrot.slane %v356, 2
      %v369 = vadd.f32 %v344, %v361
      %v370 = vadd.f32 %v345, %v362
      %v371 = vadd.f32 %v346, %v363
      %v372 = vadd.f32 %v347, %v364
      %s373 = scalar_lea.vmem %s1, 4
      %v374 = vld [vmem:[%s373] sm:$0x1]
      %v375 = vlaneseq
      %v376 = vshrl.u32 %v375, 7
      %v377 = vsub.s32 0, %v376
      %v378 = vrot.slane %v374, %v377
      %v379 = vmul.f32 %v305, %v378
      %v380 = vmul.f32 %v306, %v378
      %v381 = vmul.f32 %v307, %v378
      %v382 = vmul.f32 %v308, %v378
      %v383 = vadd.f32 %v369, %v379
      %v384 = vadd.f32 %v370, %v380
      %v385 = vadd.f32 %v371, %v381
      %v386 = vadd.f32 %v372, %v382
      %v387 = vld [vmem:[%s373 + $0x1] sm:$0x1]
      %v388 = vlaneseq
      %v389 = vshrl.u32 %v388, 7
      %v390 = vsub.s32 0, %v389
      %v391 = vrot.slane %v387, %v390
      %v392 = vmul.f32 %v305, %v391
      %v393 = vmul.f32 %v306, %v391
      %v394 = vmul.f32 %v307, %v391
      %v395 = vmul.f32 %v308, %v391
      %v400 = vrot.slane %v392, 1
      %v401 = vrot.slane %v393, 1
      %v402 = vrot.slane %v394, 1
      %v403 = vrot.slane %v395, 1
      %v408 = vadd.f32 %v383, %v400
      %v409 = vadd.f32 %v384, %v401
      %v410 = vadd.f32 %v385, %v402
      %v411 = vadd.f32 %v386, %v403
      %v412 = vld [vmem:[%s373 + $0x2] sm:$0x1]
      %v413 = vlaneseq
      %v414 = vshrl.u32 %v413, 7
      %v415 = vsub.s32 0, %v414
      %v416 = vrot.slane %v412, %v415
      %v417 = vmul.f32 %v305, %v416
      %v418 = vmul.f32 %v306, %v416
      %v419 = vmul.f32 %v307, %v416
      %v420 = vmul.f32 %v308, %v416
      %v425 = vrot.slane %v417, 2
      %v426 = vrot.slane %v418, 2
      %v427 = vrot.slane %v419, 2
      %v428 = vrot.slane %v420, 2
      %v433 = vadd.f32 %v408, %v425
      %v434 = vadd.f32 %v409, %v426
      %v435 = vadd.f32 %v410, %v427
      %v436 = vadd.f32 %v411, %v428
      %s437 = scalar_lea.vmem %s1, 8
      %v438 = vld [vmem:[%s437] sm:$0x1]
      %v439 = vlaneseq
      %v440 = vshrl.u32 %v439, 7
      %v441 = vsub.s32 0, %v440
      %v442 = vrot.slane %v438, %v441
      %v443 = vmul.f32 %v306, %v442
      %v444 = vmul.f32 %v307, %v442
      %v445 = vmul.f32 %v308, %v442
      %v446 = vmul.f32 %v309, %v442
      %v447 = vadd.f32 %v433, %v443
      %v448 = vadd.f32 %v434, %v444
      %v449 = vadd.f32 %v435, %v445
      %v450 = vadd.f32 %v436, %v446
      %v451 = vld [vmem:[%s437 + $0x1] sm:$0x1]
      %v452 = vlaneseq
      %v453 = vshrl.u32 %v452, 7
      %v454 = vsub.s32 0, %v453
      %v455 = vrot.slane %v451, %v454
      %v456 = vmul.f32 %v306, %v455
      %v457 = vmul.f32 %v307, %v455
      %v458 = vmul.f32 %v308, %v455
      %v459 = vmul.f32 %v309, %v455
      %v464 = vrot.slane %v456, 1
      %v465 = vrot.slane %v457, 1
      %v466 = vrot.slane %v458, 1
      %v467 = vrot.slane %v459, 1
      %v472 = vadd.f32 %v447, %v464
      %v473 = vadd.f32 %v448, %v465
      %v474 = vadd.f32 %v449, %v466
      %v475 = vadd.f32 %v450, %v467
      %v476 = vld [vmem:[%s437 + $0x2] sm:$0x1]
      %v477 = vlaneseq
      %v478 = vshrl.u32 %v477, 7
      %v479 = vsub.s32 0, %v478
      %v480 = vrot.slane %v476, %v479
      %v481 = vmul.f32 %v306, %v480
      %v482 = vmul.f32 %v307, %v480
      %v483 = vmul.f32 %v308, %v480
      %v484 = vmul.f32 %v309, %v480
      %v489 = vrot.slane %v481, 2
      %v490 = vrot.slane %v482, 2
      %v491 = vrot.slane %v483, 2
      %v492 = vrot.slane %v484, 2
      %v497 = vadd.f32 %v472, %v489
      %v498 = vadd.f32 %v473, %v490
      %v499 = vadd.f32 %v474, %v491
      %v500 = vadd.f32 %v475, %v492
      %v501 = vld [vmem:[%s2] sm:$0x1]
      %v503 = vlaneseq
      %v504 = vshrl.u32 %v503, 7
      %v505 = vsub.s32 0, %v504
      %v506 = vrot.slane %v501, %v505
      %v508 = vadd.f32 %v497, %v506
      %v509 = vadd.f32 %v498, %v506
      %v510 = vadd.f32 %v499, %v506
      %v511 = vadd.f32 %v500, %v506
      %v512 = vmax.f32 %v508, 0.0
      %v513 = vmax.f32 %v509, 0.0
      %v514 = vmax.f32 %v510, 0.0
      %v515 = vmax.f32 %v511, 0.0
      %v516 = vld [vmem:[%s3] sm:$0xff]
      %v517 = vld [vmem:[%s3 + $0x8] sm:$0xff]
      %v518 = vld [vmem:[%s3 + $0x10] sm:$0xff]
      %v519 = vld [vmem:[%s3 + $0x18] sm:$0xff]
      %v520 = vld [vmem:[%s4] sm:$0x1]
      %v522 = vlaneseq
      %v523 = vshrl.u32 %v522, 7
      %v524 = vsub.s32 0, %v523
      %v525 = vrot.slane %v520, %v524
      %vm527 = vcmask 261120
      %v529 = vsel %vm527, %v512, 0
      %531 = vmatprep.subr.mxu0 0.0
      %532 = vmatpush1.msra.mxu0 0.0
      %533 = vmatprep.subr.mxu0 0.0
      %534 = vmatpush1.msra.mxu0 0.0
      %535 = vmatprep.subr.mxu0 0.0
      %536 = vmatpush1.msra.mxu0 0.0
      %537 = vmatprep.subr.mxu0 0.0
      %538 = vmatpush1.msra.mxu0 0.0
      %539 = vmatprep.subr.mxu0 0.0
      %540 = vmatpush1.msra.mxu0 0.0
      %541 = vmatprep.subr.mxu0 0.0
      %542 = vmatpush1.msra.mxu0 0.0
      %543 = vmatprep.subr.mxu0 0.0
      %544 = vmatpush1.msra.mxu0 0.0
      %545 = vmatprep.subr.mxu0 0.0
      %546 = vmatpush1.msra.mxu0 0.0
      %547 = vmatprep.subr.mxu0 0.0
      %548 = vmatpush1.msra.mxu0 0.0
      %549 = vmatprep.subr.mxu0 0.0
      %550 = vmatpush1.msra.mxu0 0.0
      %551 = vmatprep.subr.mxu0 0.0
      %552 = vmatpush1.msra.mxu0 0.0
      %553 = vmatprep.subr.mxu0 0.0
      %554 = vmatpush1.msra.mxu0 0.0
      %555 = vmatprep.subr.mxu0 0.0
      %556 = vmatpush1.msra.mxu0 %v519
      %557 = vmatprep.subr.mxu0 0.0
      %558 = vmatpush1.msra.mxu0 %v518
      %559 = vmatprep.subr.mxu0 0.0
      %560 = vmatpush1.msra.mxu0 %v517
      %561 = vmatprep.subr.mxu0 0.0
      %562 = vmatpush1.msra.mxu0 %v516
      %563 = vmatprep.subr.mxu0 0.0
      %564 = vmatpush2.msra.mxu0 0.0
      %565 = vmatprep.subr.mxu0 0.0
      %566 = vmatpush2.msra.mxu0 0.0
      %567 = vmatprep.subr.mxu0 0.0
      %568 = vmatpush2.msra.mxu0 0.0
      %569 = vmatprep.subr.mxu0 0.0
      %570 = vmatpush2.msra.mxu0 0.0
      %571 = vmatprep.subr.mxu0 0.0
      %572 = vmatpush2.msra.mxu0 0.0
      %573 = vmatprep.subr.mxu0 0.0
      %574 = vmatpush2.msra.mxu0 0.0
      %575 = vmatprep.subr.mxu0 0.0
      %576 = vmatpush2.msra.mxu0 0.0
      %577 = vmatprep.subr.mxu0 0.0
      %578 = vmatpush2.msra.mxu0 0.0
      %579 = vmatprep.subr.mxu0 0.0
      %580 = vmatpush2.msra.mxu0 0.0
      %581 = vmatprep.subr.mxu0 0.0
      %582 = vmatpush2.msra.mxu0 0.0
      %583 = vmatprep.subr.mxu0 0.0
      %584 = vmatpush2.msra.mxu0 0.0
      %585 = vmatprep.subr.mxu0 0.0
      %586 = vmatpush2.msra.mxu0 0.0
      %587 = vmatprep.subr.mxu0 0.0
      %588 = vmatpush2.msra.mxu0 0.0
      %589 = vmatprep.subr.mxu0 0.0
      %590 = vmatpush2.msra.mxu0 0.0
      %591 = vmatprep.subr.mxu0 0.0
      %592 = vmatpush2.msra.mxu0 0.0
      %593 = vmatprep.subr.mxu0 0.0
      %594 = vmatpush2.msra.mxu0 0.0
      %595 = vmatprep.mubr.f32.mxu0 0.0
      %596 = vmatmul.mubr.f32.gmra.mxu0 %v529
      %v597 = vpop.f32.mrf.mxu0
      %v598 = vadd.f32 %v525, %v597
      %v599 = vpop.f32.mrf.mxu0
      %600 = vdwg.mxu0
      %vm601 = vcmask 519168
      %602 = vst.msk [vmem:[%s293] sm:$0xf] %vm601, %v598
      %v604 = vsel %vm527, %v513, 0
      %606 = vmatprep.subr.mxu0 0.0
      %607 = vmatpush1.msra.mxu0 0.0
      %608 = vmatprep.subr.mxu0 0.0
      %609 = vmatpush1.msra.mxu0 0.0
      %610 = vmatprep.subr.mxu0 0.0
      %611 = vmatpush1.msra.mxu0 0.0
      %612 = vmatprep.subr.mxu0 0.0
      %613 = vmatpush1.msra.mxu0 0.0
      %614 = vmatprep.subr.mxu0 0.0
      %615 = vmatpush1.msra.mxu0 0.0
      %616 = vmatprep.subr.mxu0 0.0
      %617 = vmatpush1.msra.mxu0 0.0
      %618 = vmatprep.subr.mxu0 0.0
      %619 = vmatpush1.msra.mxu0 0.0
      %620 = vmatprep.subr.mxu0 0.0
      %621 = vmatpush1.msra.mxu0 0.0
      %622 = vmatprep.subr.mxu0 0.0
      %623 = vmatpush1.msra.mxu0 0.0
      %624 = vmatprep.subr.mxu0 0.0
      %625 = vmatpush1.msra.mxu0 0.0
      %626 = vmatprep.subr.mxu0 0.0
      %627 = vmatpush1.msra.mxu0 0.0
      %628 = vmatprep.subr.mxu0 0.0
      %629 = vmatpush1.msra.mxu0 0.0
      %630 = vmatprep.subr.mxu0 0.0
      %631 = vmatpush1.msra.mxu0 %v519
      %632 = vmatprep.subr.mxu0 0.0
      %633 = vmatpush1.msra.mxu0 %v518
      %634 = vmatprep.subr.mxu0 0.0
      %635 = vmatpush1.msra.mxu0 %v517
      %636 = vmatprep.subr.mxu0 0.0
      %637 = vmatpush1.msra.mxu0 %v516
      %638 = vmatprep.subr.mxu0 0.0
      %639 = vmatpush2.msra.mxu0 0.0
      %640 = vmatprep.subr.mxu0 0.0
      %641 = vmatpush2.msra.mxu0 0.0
      %642 = vmatprep.subr.mxu0 0.0
      %643 = vmatpush2.msra.mxu0 0.0
      %644 = vmatprep.subr.mxu0 0.0
      %645 = vmatpush2.msra.mxu0 0.0
      %646 = vmatprep.subr.mxu0 0.0
      %647 = vmatpush2.msra.mxu0 0.0
      %648 = vmatprep.subr.mxu0 0.0
      %649 = vmatpush2.msra.mxu0 0.0
      %650 = vmatprep.subr.mxu0 0.0
      %651 = vmatpush2.msra.mxu0 0.0
      %652 = vmatprep.subr.mxu0 0.0
      %653 = vmatpush2.msra.mxu0 0.0
      %654 = vmatprep.subr.mxu0 0.0
      %655 = vmatpush2.msra.mxu0 0.0
      %656 = vmatprep.subr.mxu0 0.0
      %657 = vmatpush2.msra.mxu0 0.0
      %658 = vmatprep.subr.mxu0 0.0
      %659 = vmatpush2.msra.mxu0 0.0
      %660 = vmatprep.subr.mxu0 0.0
      %661 = vmatpush2.msra.mxu0 0.0
      %662 = vmatprep.subr.mxu0 0.0
      %663 = vmatpush2.msra.mxu0 0.0
      %664 = vmatprep.subr.mxu0 0.0
      %665 = vmatpush2.msra.mxu0 0.0
      %666 = vmatprep.subr.mxu0 0.0
      %667 = vmatpush2.msra.mxu0 0.0
      %668 = vmatprep.subr.mxu0 0.0
      %669 = vmatpush2.msra.mxu0 0.0
      %670 = vmatprep.mubr.f32.mxu0 0.0
      %671 = vmatmul.mubr.f32.gmra.mxu0 %v604
      %v672 = vpop.f32.mrf.mxu0
      %v673 = vadd.f32 %v525, %v672
      %v674 = vpop.f32.mrf.mxu0
      %675 = vdwg.mxu0
      %s676 = scalar_lea.vmem %s293, 4
      %677 = vst.msk [vmem:[%s676] sm:$0xf] %vm601, %v673
      %v679 = vsel %vm527, %v514, 0
      %681 = vmatprep.subr.mxu0 0.0
      %682 = vmatpush1.msra.mxu0 0.0
      %683 = vmatprep.subr.mxu0 0.0
      %684 = vmatpush1.msra.mxu0 0.0
      %685 = vmatprep.subr.mxu0 0.0
      %686 = vmatpush1.msra.mxu0 0.0
      %687 = vmatprep.subr.mxu0 0.0
      %688 = vmatpush1.msra.mxu0 0.0
      %689 = vmatprep.subr.mxu0 0.0
      %690 = vmatpush1.msra.mxu0 0.0
      %691 = vmatprep.subr.mxu0 0.0
      %692 = vmatpush1.msra.mxu0 0.0
      %693 = vmatprep.subr.mxu0 0.0
      %694 = vmatpush1.msra.mxu0 0.0
      %695 = vmatprep.subr.mxu0 0.0
      %696 = vmatpush1.msra.mxu0 0.0
      %697 = vmatprep.subr.mxu0 0.0
      %698 = vmatpush1.msra.mxu0 0.0
      %699 = vmatprep.subr.mxu0 0.0
      %700 = vmatpush1.msra.mxu0 0.0
      %701 = vmatprep.subr.mxu0 0.0
      %702 = vmatpush1.msra.mxu0 0.0
      %703 = vmatprep.subr.mxu0 0.0
      %704 = vmatpush1.msra.mxu0 0.0
      %705 = vmatprep.subr.mxu0 0.0
      %706 = vmatpush1.msra.mxu0 %v519
      %707 = vmatprep.subr.mxu0 0.0
      %708 = vmatpush1.msra.mxu0 %v518
      %709 = vmatprep.subr.mxu0 0.0
      %710 = vmatpush1.msra.mxu0 %v517
      %711 = vmatprep.subr.mxu0 0.0
      %712 = vmatpush1.msra.mxu0 %v516
      %713 = vmatprep.subr.mxu0 0.0
      %714 = vmatpush2.msra.mxu0 0.0
      %715 = vmatprep.subr.mxu0 0.0
      %716 = vmatpush2.msra.mxu0 0.0
      %717 = vmatprep.subr.mxu0 0.0
      %718 = vmatpush2.msra.mxu0 0.0
      %719 = vmatprep.subr.mxu0 0.0
      %720 = vmatpush2.msra.mxu0 0.0
      %721 = vmatprep.subr.mxu0 0.0
      %722 = vmatpush2.msra.mxu0 0.0
      %723 = vmatprep.subr.mxu0 0.0
      %724 = vmatpush2.msra.mxu0 0.0
      %725 = vmatprep.subr.mxu0 0.0
      %726 = vmatpush2.msra.mxu0 0.0
      %727 = vmatprep.subr.mxu0 0.0
      %728 = vmatpush2.msra.mxu0 0.0
      %729 = vmatprep.subr.mxu0 0.0
      %730 = vmatpush2.msra.mxu0 0.0
      %731 = vmatprep.subr.mxu0 0.0
      %732 = vmatpush2.msra.mxu0 0.0
      %733 = vmatprep.subr.mxu0 0.0
      %734 = vmatpush2.msra.mxu0 0.0
      %735 = vmatprep.subr.mxu0 0.0
      %736 = vmatpush2.msra.mxu0 0.0
      %737 = vmatprep.subr.mxu0 0.0
      %738 = vmatpush2.msra.mxu0 0.0
      %739 = vmatprep.subr.mxu0 0.0
      %740 = vmatpush2.msra.mxu0 0.0
      %741 = vmatprep.subr.mxu0 0.0
      %742 = vmatpush2.msra.mxu0 0.0
      %743 = vmatprep.subr.mxu0 0.0
      %744 = vmatpush2.msra.mxu0 0.0
      %745 = vmatprep.mubr.f32.mxu0 0.0
      %746 = vmatmul.mubr.f32.gmra.mxu0 %v679
      %v747 = vpop.f32.mrf.mxu0
      %v748 = vadd.f32 %v525, %v747
      %v749 = vpop.f32.mrf.mxu0
      %750 = vdwg.mxu0
      %s751 = scalar_lea.vmem %s293, 8
      %752 = vst.msk [vmem:[%s751] sm:$0xf] %vm601, %v748
      %v754 = vsel %vm527, %v515, 0
      %756 = vmatprep.subr.mxu0 0.0
      %757 = vmatpush1.msra.mxu0 0.0
      %758 = vmatprep.subr.mxu0 0.0
      %759 = vmatpush1.msra.mxu0 0.0
      %760 = vmatprep.subr.mxu0 0.0
      %761 = vmatpush1.msra.mxu0 0.0
      %762 = vmatprep.subr.mxu0 0.0
      %763 = vmatpush1.msra.mxu0 0.0
      %764 = vmatprep.subr.mxu0 0.0
      %765 = vmatpush1.msra.mxu0 0.0
      %766 = vmatprep.subr.mxu0 0.0
      %767 = vmatpush1.msra.mxu0 0.0
      %768 = vmatprep.subr.mxu0 0.0
      %769 = vmatpush1.msra.mxu0 0.0
      %770 = vmatprep.subr.mxu0 0.0
      %771 = vmatpush1.msra.mxu0 0.0
      %772 = vmatprep.subr.mxu0 0.0
      %773 = vmatpush1.msra.mxu0 0.0
      %774 = vmatprep.subr.mxu0 0.0
      %775 = vmatpush1.msra.mxu0 0.0
      %776 = vmatprep.subr.mxu0 0.0
      %777 = vmatpush1.msra.mxu0 0.0
      %778 = vmatprep.subr.mxu0 0.0
      %779 = vmatpush1.msra.mxu0 0.0
      %780 = vmatprep.subr.mxu0 0.0
      %781 = vmatpush1.msra.mxu0 %v519
      %782 = vmatprep.subr.mxu0 0.0
      %783 = vmatpush1.msra.mxu0 %v518
      %784 = vmatprep.subr.mxu0 0.0
      %785 = vmatpush1.msra.mxu0 %v517
      %786 = vmatprep.subr.mxu0 0.0
      %787 = vmatpush1.msra.mxu0 %v516
      %788 = vmatprep.subr.mxu0 0.0
      %789 = vmatpush2.msra.mxu0 0.0
      %790 = vmatprep.subr.mxu0 0.0
      %791 = vmatpush2.msra.mxu0 0.0
      %792 = vmatprep.subr.mxu0 0.0
      %793 = vmatpush2.msra.mxu0 0.0
      %794 = vmatprep.subr.mxu0 0.0
      %795 = vmatpush2.msra.mxu0 0.0
      %796 = vmatprep.subr.mxu0 0.0
      %797 = vmatpush2.msra.mxu0 0.0
      %798 = vmatprep.subr.mxu0 0.0
      %799 = vmatpush2.msra.mxu0 0.0
      %800 = vmatprep.subr.mxu0 0.0
      %801 = vmatpush2.msra.mxu0 0.0
      %802 = vmatprep.subr.mxu0 0.0
      %803 = vmatpush2.msra.mxu0 0.0
      %804 = vmatprep.subr.mxu0 0.0
      %805 = vmatpush2.msra.mxu0 0.0
      %806 = vmatprep.subr.mxu0 0.0
      %807 = vmatpush2.msra.mxu0 0.0
      %808 = vmatprep.subr.mxu0 0.0
      %809 = vmatpush2.msra.mxu0 0.0
      %810 = vmatprep.subr.mxu0 0.0
      %811 = vmatpush2.msra.mxu0 0.0
      %812 = vmatprep.subr.mxu0 0.0
      %813 = vmatpush2.msra.mxu0 0.0
      %814 = vmatprep.subr.mxu0 0.0
      %815 = vmatpush2.msra.mxu0 0.0
      %816 = vmatprep.subr.mxu0 0.0
      %817 = vmatpush2.msra.mxu0 0.0
      %818 = vmatprep.subr.mxu0 0.0
      %819 = vmatpush2.msra.mxu0 0.0
      %820 = vmatprep.mubr.f32.mxu0 0.0
      %821 = vmatmul.mubr.f32.gmra.mxu0 %v754
      %v822 = vpop.f32.mrf.mxu0
      %v823 = vadd.f32 %v525, %v822
      %v824 = vpop.f32.mrf.mxu0
      %825 = vdwg.mxu0
      %s826 = scalar_lea.vmem %s293, 12
      %827 = vst.msk [vmem:[%s826] sm:$0xf] %vm601, %v823
      %s828 = scalar_lea.vmem %s1, 12
      %v829 = vld [vmem:[%s828] sm:$0x1]
      %v830 = vlaneseq
      %v831 = vshrl.u32 %v830, 7
      %v832 = vsub.s32 0, %v831
      %v833 = vrot.slane %v829, %v832
      %v834 = vmul.f32 %v304, %v833
      %v835 = vmul.f32 %v305, %v833
      %v836 = vmul.f32 %v306, %v833
      %v837 = vmul.f32 %v307, %v833
      %v838 = vadd.f32 %v834, 0.0
      %v839 = vadd.f32 %v835, 0.0
      %v840 = vadd.f32 %v836, 0.0
      %v841 = vadd.f32 %v837, 0.0
      %v842 = vld [vmem:[%s828 + $0x1] sm:$0x1]
      %v843 = vlaneseq
      %v844 = vshrl.u32 %v843, 7
      %v845 = vsub.s32 0, %v844
      %v846 = vrot.slane %v842, %v845
      %v847 = vmul.f32 %v304, %v846
      %v848 = vmul.f32 %v305, %v846
      %v849 = vmul.f32 %v306, %v846
      %v850 = vmul.f32 %v307, %v846
      %v855 = vrot.slane %v847, 1
      %v856 = vrot.slane %v848, 1
      %v857 = vrot.slane %v849, 1
      %v858 = vrot.slane %v850, 1
      %v863 = vadd.f32 %v838, %v855
      %v864 = vadd.f32 %v839, %v856
      %v865 = vadd.f32 %v840, %v857
      %v866 = vadd.f32 %v841, %v858
      %v867 = vld [vmem:[%s828 + $0x2] sm:$0x1]
      %v868 = vlaneseq
      %v869 = vshrl.u32 %v868, 7
      %v870 = vsub.s32 0, %v869
      %v871 = vrot.slane %v867, %v870
      %v872 = vmul.f32 %v304, %v871
      %v873 = vmul.f32 %v305, %v871
      %v874 = vmul.f32 %v306, %v871
      %v875 = vmul.f32 %v307, %v871
      %v880 = vrot.slane %v872, 2
      %v881 = vrot.slane %v873, 2
      %v882 = vrot.slane %v874, 2
      %v883 = vrot.slane %v875, 2
      %v888 = vadd.f32 %v863, %v880
      %v889 = vadd.f32 %v864, %v881
      %v890 = vadd.f32 %v865, %v882
      %v891 = vadd.f32 %v866, %v883
      %s892 = scalar_lea.vmem %s1, 16
      %v893 = vld [vmem:[%s892] sm:$0x1]
      %v894 = vlaneseq
      %v895 = vshrl.u32 %v894, 7
      %v896 = vsub.s32 0, %v895
      %v897 = vrot.slane %v893, %v896
      %v898 = vmul.f32 %v305, %v897
      %v899 = vmul.f32 %v306, %v897
      %v900 = vmul.f32 %v307, %v897
      %v901 = vmul.f32 %v308, %v897
      %v902 = vadd.f32 %v888, %v898
      %v903 = vadd.f32 %v889, %v899
      %v904 = vadd.f32 %v890, %v900
      %v905 = vadd.f32 %v891, %v901
      %v906 = vld [vmem:[%s892 + $0x1] sm:$0x1]
      %v907 = vlaneseq
      %v908 = vshrl.u32 %v907, 7
      %v909 = vsub.s32 0, %v908
      %v910 = vrot.slane %v906, %v909
      %v911 = vmul.f32 %v305, %v910
      %v912 = vmul.f32 %v306, %v910
      %v913 = vmul.f32 %v307, %v910
      %v914 = vmul.f32 %v308, %v910
      %v919 = vrot.slane %v911, 1
      %v920 = vrot.slane %v912, 1
      %v921 = vrot.slane %v913, 1
      %v922 = vrot.slane %v914, 1
      %v927 = vadd.f32 %v902, %v919
      %v928 = vadd.f32 %v903, %v920
      %v929 = vadd.f32 %v904, %v921
      %v930 = vadd.f32 %v905, %v922
      %v931 = vld [vmem:[%s892 + $0x2] sm:$0x1]
      %v932 = vlaneseq
      %v933 = vshrl.u32 %v932, 7
      %v934 = vsub.s32 0, %v933
      %v935 = vrot.slane %v931, %v934
      %v936 = vmul.f32 %v305, %v935
      %v937 = vmul.f32 %v306, %v935
      %v938 = vmul.f32 %v307, %v935
      %v939 = vmul.f32 %v308, %v935
      %v944 = vrot.slane %v936, 2
      %v945 = vrot.slane %v937, 2
      %v946 = vrot.slane %v938, 2
      %v947 = vrot.slane %v939, 2
      %v952 = vadd.f32 %v927, %v944
      %v953 = vadd.f32 %v928, %v945
      %v954 = vadd.f32 %v929, %v946
      %v955 = vadd.f32 %v930, %v947
      %s956 = scalar_lea.vmem %s1, 20
      %v957 = vld [vmem:[%s956] sm:$0x1]
      %v958 = vlaneseq
      %v959 = vshrl.u32 %v958, 7
      %v960 = vsub.s32 0, %v959
      %v961 = vrot.slane %v957, %v960
      %v962 = vmul.f32 %v306, %v961
      %v963 = vmul.f32 %v307, %v961
      %v964 = vmul.f32 %v308, %v961
      %v965 = vmul.f32 %v309, %v961
      %v966 = vadd.f32 %v952, %v962
      %v967 = vadd.f32 %v953, %v963
      %v968 = vadd.f32 %v954, %v964
      %v969 = vadd.f32 %v955, %v965
      %v970 = vld [vmem:[%s956 + $0x1] sm:$0x1]
      %v971 = vlaneseq
      %v972 = vshrl.u32 %v971, 7
      %v973 = vsub.s32 0, %v972
      %v974 = vrot.slane %v970, %v973
      %v975 = vmul.f32 %v306, %v974
      %v976 = vmul.f32 %v307, %v974
      %v977 = vmul.f32 %v308, %v974
      %v978 = vmul.f32 %v309, %v974
      %v983 = vrot.slane %v975, 1
      %v984 = vrot.slane %v976, 1
      %v985 = vrot.slane %v977, 1
      %v986 = vrot.slane %v978, 1
      %v991 = vadd.f32 %v966, %v983
      %v992 = vadd.f32 %v967, %v984
      %v993 = vadd.f32 %v968, %v985
      %v994 = vadd.f32 %v969, %v986
      %v995 = vld [vmem:[%s956 + $0x2] sm:$0x1]
      %v996 = vlaneseq
      %v997 = vshrl.u32 %v996, 7
      %v998 = vsub.s32 0, %v997
      %v999 = vrot.slane %v995, %v998
      %v1000 = vmul.f32 %v306, %v999
      %v1001 = vmul.f32 %v307, %v999
      %v1002 = vmul.f32 %v308, %v999
      %v1003 = vmul.f32 %v309, %v999
      %v1008 = vrot.slane %v1000, 2
      %v1009 = vrot.slane %v1001, 2
      %v1010 = vrot.slane %v1002, 2
      %v1011 = vrot.slane %v1003, 2
      %v1016 = vadd.f32 %v991, %v1008
      %v1017 = vadd.f32 %v992, %v1009
      %v1018 = vadd.f32 %v993, %v1010
      %v1019 = vadd.f32 %v994, %v1011
      %s1020 = scalar_lea.vmem %s2, 1
      %v1021 = vld [vmem:[%s1020] sm:$0x1]
      %v1023 = vlaneseq
      %v1024 = vshrl.u32 %v1023, 7
      %v1025 = vsub.s32 0, %v1024
      %v1026 = vrot.slane %v1021, %v1025
      %v1028 = vadd.f32 %v1016, %v1026
      %v1029 = vadd.f32 %v1017, %v1026
      %v1030 = vadd.f32 %v1018, %v1026
      %v1031 = vadd.f32 %v1019, %v1026
      %v1032 = vmax.f32 %v1028, 0.0
      %v1033 = vmax.f32 %v1029, 0.0
      %v1034 = vmax.f32 %v1030, 0.0
      %v1035 = vmax.f32 %v1031, 0.0
      %s1036 = scalar_lea.vmem %s3, 32
      %v1037 = vld [vmem:[%s1036] sm:$0xff]
      %v1038 = vld [vmem:[%s1036 + $0x8] sm:$0xff]
      %v1039 = vld [vmem:[%s1036 + $0x10] sm:$0xff]
      %v1040 = vld [vmem:[%s1036 + $0x18] sm:$0xff]
      %s1041 = scalar_lea.vmem %s4, 1
      %v1042 = vld [vmem:[%s1041] sm:$0x1]
      %v1044 = vlaneseq
      %v1045 = vshrl.u32 %v1044, 7
      %v1046 = vsub.s32 0, %v1045
      %v1047 = vrot.slane %v1042, %v1046
      %v1050 = vsel %vm527, %v1032, 0
      %1052 = vmatprep.subr.mxu0 0.0
      %1053 = vmatpush1.msra.mxu0 0.0
      %1054 = vmatprep.subr.mxu0 0.0
      %1055 = vmatpush1.msra.mxu0 0.0
      %1056 = vmatprep.subr.mxu0 0.0
      %1057 = vmatpush1.msra.mxu0 0.0
      %1058 = vmatprep.subr.mxu0 0.0
      %1059 = vmatpush1.msra.mxu0 0.0
      %1060 = vmatprep.subr.mxu0 0.0
      %1061 = vmatpush1.msra.mxu0 0.0
      %1062 = vmatprep.subr.mxu0 0.0
      %1063 = vmatpush1.msra.mxu0 0.0
      %1064 = vmatprep.subr.mxu0 0.0
      %1065 = vmatpush1.msra.mxu0 0.0
      %1066 = vmatprep.subr.mxu0 0.0
      %1067 = vmatpush1.msra.mxu0 0.0
      %1068 = vmatprep.subr.mxu0 0.0
      %1069 = vmatpush1.msra.mxu0 0.0
      %1070 = vmatprep.subr.mxu0 0.0
      %1071 = vmatpush1.msra.mxu0 0.0
      %1072 = vmatprep.subr.mxu0 0.0
      %1073 = vmatpush1.msra.mxu0 0.0
      %1074 = vmatprep.subr.mxu0 0.0
      %1075 = vmatpush1.msra.mxu0 0.0
      %1076 = vmatprep.subr.mxu0 0.0
      %1077 = vmatpush1.msra.mxu0 %v1040
      %1078 = vmatprep.subr.mxu0 0.0
      %1079 = vmatpush1.msra.mxu0 %v1039
      %1080 = vmatprep.subr.mxu0 0.0
      %1081 = vmatpush1.msra.mxu0 %v1038
      %1082 = vmatprep.subr.mxu0 0.0
      %1083 = vmatpush1.msra.mxu0 %v1037
      %1084 = vmatprep.subr.mxu0 0.0
      %1085 = vmatpush2.msra.mxu0 0.0
      %1086 = vmatprep.subr.mxu0 0.0
      %1087 = vmatpush2.msra.mxu0 0.0
      %1088 = vmatprep.subr.mxu0 0.0
      %1089 = vmatpush2.msra.mxu0 0.0
      %1090 = vmatprep.subr.mxu0 0.0
      %1091 = vmatpush2.msra.mxu0 0.0
      %1092 = vmatprep.subr.mxu0 0.0
      %1093 = vmatpush2.msra.mxu0 0.0
      %1094 = vmatprep.subr.mxu0 0.0
      %1095 = vmatpush2.msra.mxu0 0.0
      %1096 = vmatprep.subr.mxu0 0.0
      %1097 = vmatpush2.msra.mxu0 0.0
      %1098 = vmatprep.subr.mxu0 0.0
      %1099 = vmatpush2.msra.mxu0 0.0
      %1100 = vmatprep.subr.mxu0 0.0
      %1101 = vmatpush2.msra.mxu0 0.0
      %1102 = vmatprep.subr.mxu0 0.0
      %1103 = vmatpush2.msra.mxu0 0.0
      %1104 = vmatprep.subr.mxu0 0.0
      %1105 = vmatpush2.msra.mxu0 0.0
      %1106 = vmatprep.subr.mxu0 0.0
      %1107 = vmatpush2.msra.mxu0 0.0
      %1108 = vmatprep.subr.mxu0 0.0
      %1109 = vmatpush2.msra.mxu0 0.0
      %1110 = vmatprep.subr.mxu0 0.0
      %1111 = vmatpush2.msra.mxu0 0.0
      %1112 = vmatprep.subr.mxu0 0.0
      %1113 = vmatpush2.msra.mxu0 0.0
      %1114 = vmatprep.subr.mxu0 0.0
      %1115 = vmatpush2.msra.mxu0 0.0
      %1116 = vmatprep.mubr.f32.mxu0 0.0
      %1117 = vmatmul.mubr.f32.gmra.mxu0 %v1050
      %v1118 = vpop.f32.mrf.mxu0
      %v1119 = vadd.f32 %v1047, %v1118
      %v1120 = vpop.f32.mrf.mxu0
      %1121 = vdwg.mxu0
      %1122 = vst.msk [vmem:[%s298] sm:$0xf] %vm601, %v1119
      %v1124 = vsel %vm527, %v1033, 0
      %1126 = vmatprep.subr.mxu0 0.0
      %1127 = vmatpush1.msra.mxu0 0.0
      %1128 = vmatprep.subr.mxu0 0.0
      %1129 = vmatpush1.msra.mxu0 0.0
      %1130 = vmatprep.subr.mxu0 0.0
      %1131 = vmatpush1.msra.mxu0 0.0
      %1132 = vmatprep.subr.mxu0 0.0
      %1133 = vmatpush1.msra.mxu0 0.0
      %1134 = vmatprep.subr.mxu0 0.0
      %1135 = vmatpush1.msra.mxu0 0.0
      %1136 = vmatprep.subr.mxu0 0.0
      %1137 = vmatpush1.msra.mxu0 0.0
      %1138 = vmatprep.subr.mxu0 0.0
      %1139 = vmatpush1.msra.mxu0 0.0
      %1140 = vmatprep.subr.mxu0 0.0
      %1141 = vmatpush1.msra.mxu0 0.0
      %1142 = vmatprep.subr.mxu0 0.0
      %1143 = vmatpush1.msra.mxu0 0.0
      %1144 = vmatprep.subr.mxu0 0.0
      %1145 = vmatpush1.msra.mxu0 0.0
      %1146 = vmatprep.subr.mxu0 0.0
      %1147 = vmatpush1.msra.mxu0 0.0
      %1148 = vmatprep.subr.mxu0 0.0
      %1149 = vmatpush1.msra.mxu0 0.0
      %1150 = vmatprep.subr.mxu0 0.0
      %1151 = vmatpush1.msra.mxu0 %v1040
      %1152 = vmatprep.subr.mxu0 0.0
      %1153 = vmatpush1.msra.mxu0 %v1039
      %1154 = vmatprep.subr.mxu0 0.0
      %1155 = vmatpush1.msra.mxu0 %v1038
      %1156 = vmatprep.subr.mxu0 0.0
      %1157 = vmatpush1.msra.mxu0 %v1037
      %1158 = vmatprep.subr.mxu0 0.0
      %1159 = vmatpush2.msra.mxu0 0.0
      %1160 = vmatprep.subr.mxu0 0.0
      %1161 = vmatpush2.msra.mxu0 0.0
      %1162 = vmatprep.subr.mxu0 0.0
      %1163 = vmatpush2.msra.mxu0 0.0
      %1164 = vmatprep.subr.mxu0 0.0
      %1165 = vmatpush2.msra.mxu0 0.0
      %1166 = vmatprep.subr.mxu0 0.0
      %1167 = vmatpush2.msra.mxu0 0.0
      %1168 = vmatprep.subr.mxu0 0.0
      %1169 = vmatpush2.msra.mxu0 0.0
      %1170 = vmatprep.subr.mxu0 0.0
      %1171 = vmatpush2.msra.mxu0 0.0
      %1172 = vmatprep.subr.mxu0 0.0
      %1173 = vmatpush2.msra.mxu0 0.0
      %1174 = vmatprep.subr.mxu0 0.0
      %1175 = vmatpush2.msra.mxu0 0.0
      %1176 = vmatprep.subr.mxu0 0.0
      %1177 = vmatpush2.msra.mxu0 0.0
      %1178 = vmatprep.subr.mxu0 0.0
      %1179 = vmatpush2.msra.mxu0 0.0
      %1180 = vmatprep.subr.mxu0 0.0
      %1181 = vmatpush2.msra.mxu0 0.0
      %1182 = vmatprep.subr.mxu0 0.0
      %1183 = vmatpush2.msra.mxu0 0.0
      %1184 = vmatprep.subr.mxu0 0.0
      %1185 = vmatpush2.msra.mxu0 0.0
      %1186 = vmatprep.subr.mxu0 0.0
      %1187 = vmatpush2.msra.mxu0 0.0
      %1188 = vmatprep.subr.mxu0 0.0
      %1189 = vmatpush2.msra.mxu0 0.0
      %1190 = vmatprep.mubr.f32.mxu0 0.0
      %1191 = vmatmul.mubr.f32.gmra.mxu0 %v1124
      %v1192 = vpop.f32.mrf.mxu0
      %v1193 = vadd.f32 %v1047, %v1192
      %v1194 = vpop.f32.mrf.mxu0
      %1195 = vdwg.mxu0
      %s1196 = scalar_lea.vmem %s298, 4
      %1197 = vst.msk [vmem:[%s1196] sm:$0xf] %vm601, %v1193
      %v1199 = vsel %vm527, %v1034, 0
      %1201 = vmatprep.subr.mxu0 0.0
      %1202 = vmatpush1.msra.mxu0 0.0
      %1203 = vmatprep.subr.mxu0 0.0
      %1204 = vmatpush1.msra.mxu0 0.0
      %1205 = vmatprep.subr.mxu0 0.0
      %1206 = vmatpush1.msra.mxu0 0.0
      %1207 = vmatprep.subr.mxu0 0.0
      %1208 = vmatpush1.msra.mxu0 0.0
      %1209 = vmatprep.subr.mxu0 0.0
      %1210 = vmatpush1.msra.mxu0 0.0
      %1211 = vmatprep.subr.mxu0 0.0
      %1212 = vmatpush1.msra.mxu0 0.0
      %1213 = vmatprep.subr.mxu0 0.0
      %1214 = vmatpush1.msra.mxu0 0.0
      %1215 = vmatprep.subr.mxu0 0.0
      %1216 = vmatpush1.msra.mxu0 0.0
      %1217 = vmatprep.subr.mxu0 0.0
      %1218 = vmatpush1.msra.mxu0 0.0
      %1219 = vmatprep.subr.mxu0 0.0
      %1220 = vmatpush1.msra.mxu0 0.0
      %1221 = vmatprep.subr.mxu0 0.0
      %1222 = vmatpush1.msra.mxu0 0.0
      %1223 = vmatprep.subr.mxu0 0.0
      %1224 = vmatpush1.msra.mxu0 0.0
      %1225 = vmatprep.subr.mxu0 0.0
      %1226 = vmatpush1.msra.mxu0 %v1040
      %1227 = vmatprep.subr.mxu0 0.0
      %1228 = vmatpush1.msra.mxu0 %v1039
      %1229 = vmatprep.subr.mxu0 0.0
      %1230 = vmatpush1.msra.mxu0 %v1038
      %1231 = vmatprep.subr.mxu0 0.0
      %1232 = vmatpush1.msra.mxu0 %v1037
      %1233 = vmatprep.subr.mxu0 0.0
      %1234 = vmatpush2.msra.mxu0 0.0
      %1235 = vmatprep.subr.mxu0 0.0
      %1236 = vmatpush2.msra.mxu0 0.0
      %1237 = vmatprep.subr.mxu0 0.0
      %1238 = vmatpush2.msra.mxu0 0.0
      %1239 = vmatprep.subr.mxu0 0.0
      %1240 = vmatpush2.msra.mxu0 0.0
      %1241 = vmatprep.subr.mxu0 0.0
      %1242 = vmatpush2.msra.mxu0 0.0
      %1243 = vmatprep.subr.mxu0 0.0
      %1244 = vmatpush2.msra.mxu0 0.0
      %1245 = vmatprep.subr.mxu0 0.0
      %1246 = vmatpush2.msra.mxu0 0.0
      %1247 = vmatprep.subr.mxu0 0.0
      %1248 = vmatpush2.msra.mxu0 0.0
      %1249 = vmatprep.subr.mxu0 0.0
      %1250 = vmatpush2.msra.mxu0 0.0
      %1251 = vmatprep.subr.mxu0 0.0
      %1252 = vmatpush2.msra.mxu0 0.0
      %1253 = vmatprep.subr.mxu0 0.0
      %1254 = vmatpush2.msra.mxu0 0.0
      %1255 = vmatprep.subr.mxu0 0.0
      %1256 = vmatpush2.msra.mxu0 0.0
      %1257 = vmatprep.subr.mxu0 0.0
      %1258 = vmatpush2.msra.mxu0 0.0
      %1259 = vmatprep.subr.mxu0 0.0
      %1260 = vmatpush2.msra.mxu0 0.0
      %1261 = vmatprep.subr.mxu0 0.0
      %1262 = vmatpush2.msra.mxu0 0.0
      %1263 = vmatprep.subr.mxu0 0.0
      %1264 = vmatpush2.msra.mxu0 0.0
      %1265 = vmatprep.mubr.f32.mxu0 0.0
      %1266 = vmatmul.mubr.f32.gmra.mxu0 %v1199
      %v1267 = vpop.f32.mrf.mxu0
      %v1268 = vadd.f32 %v1047, %v1267
      %v1269 = vpop.f32.mrf.mxu0
      %1270 = vdwg.mxu0
      %s1271 = scalar_lea.vmem %s298, 8
      %1272 = vst.msk [vmem:[%s1271] sm:$0xf] %vm601, %v1268
      %v1274 = vsel %vm527, %v1035, 0
      %1276 = vmatprep.subr.mxu0 0.0
      %1277 = vmatpush1.msra.mxu0 0.0
      %1278 = vmatprep.subr.mxu0 0.0
      %1279 = vmatpush1.msra.mxu0 0.0
      %1280 = vmatprep.subr.mxu0 0.0
      %1281 = vmatpush1.msra.mxu0 0.0
      %1282 = vmatprep.subr.mxu0 0.0
      %1283 = vmatpush1.msra.mxu0 0.0
      %1284 = vmatprep.subr.mxu0 0.0
      %1285 = vmatpush1.msra.mxu0 0.0
      %1286 = vmatprep.subr.mxu0 0.0
      %1287 = vmatpush1.msra.mxu0 0.0
      %1288 = vmatprep.subr.mxu0 0.0
      %1289 = vmatpush1.msra.mxu0 0.0
      %1290 = vmatprep.subr.mxu0 0.0
      %1291 = vmatpush1.msra.mxu0 0.0
      %1292 = vmatprep.subr.mxu0 0.0
      %1293 = vmatpush1.msra.mxu0 0.0
      %1294 = vmatprep.subr.mxu0 0.0
      %1295 = vmatpush1.msra.mxu0 0.0
      %1296 = vmatprep.subr.mxu0 0.0
      %1297 = vmatpush1.msra.mxu0 0.0
      %1298 = vmatprep.subr.mxu0 0.0
      %1299 = vmatpush1.msra.mxu0 0.0
      %1300 = vmatprep.subr.mxu0 0.0
      %1301 = vmatpush1.msra.mxu0 %v1040
      %1302 = vmatprep.subr.mxu0 0.0
      %1303 = vmatpush1.msra.mxu0 %v1039
      %1304 = vmatprep.subr.mxu0 0.0
      %1305 = vmatpush1.msra.mxu0 %v1038
      %1306 = vmatprep.subr.mxu0 0.0
      %1307 = vmatpush1.msra.mxu0 %v1037
      %1308 = vmatprep.subr.mxu0 0.0
      %1309 = vmatpush2.msra.mxu0 0.0
      %1310 = vmatprep.subr.mxu0 0.0
      %1311 = vmatpush2.msra.mxu0 0.0
      %1312 = vmatprep.subr.mxu0 0.0
      %1313 = vmatpush2.msra.mxu0 0.0
      %1314 = vmatprep.subr.mxu0 0.0
      %1315 = vmatpush2.msra.mxu0 0.0
      %1316 = vmatprep.subr.mxu0 0.0
      %1317 = vmatpush2.msra.mxu0 0.0
      %1318 = vmatprep.subr.mxu0 0.0
      %1319 = vmatpush2.msra.mxu0 0.0
      %1320 = vmatprep.subr.mxu0 0.0
      %1321 = vmatpush2.msra.mxu0 0.0
      %1322 = vmatprep.subr.mxu0 0.0
      %1323 = vmatpush2.msra.mxu0 0.0
      %1324 = vmatprep.subr.mxu0 0.0
      %1325 = vmatpush2.msra.mxu0 0.0
      %1326 = vmatprep.subr.mxu0 0.0
      %1327 = vmatpush2.msra.mxu0 0.0
      %1328 = vmatprep.subr.mxu0 0.0
      %1329 = vmatpush2.msra.mxu0 0.0
      %1330 = vmatprep.subr.mxu0 0.0
      %1331 = vmatpush2.msra.mxu0 0.0
      %1332 = vmatprep.subr.mxu0 0.0
      %1333 = vmatpush2.msra.mxu0 0.0
      %1334 = vmatprep.subr.mxu0 0.0
      %1335 = vmatpush2.msra.mxu0 0.0
      %1336 = vmatprep.subr.mxu0 0.0
      %1337 = vmatpush2.msra.mxu0 0.0
      %1338 = vmatprep.subr.mxu0 0.0
      %1339 = vmatpush2.msra.mxu0 0.0
      %1340 = vmatprep.mubr.f32.mxu0 0.0
      %1341 = vmatmul.mubr.f32.gmra.mxu0 %v1274
      %v1342 = vpop.f32.mrf.mxu0
      %v1343 = vadd.f32 %v1047, %v1342
      %v1344 = vpop.f32.mrf.mxu0
      %1345 = vdwg.mxu0
      %s1346 = scalar_lea.vmem %s298, 12
      %1347 = vst.msk [vmem:[%s1346] sm:$0xf] %vm601, %v1343
      %s1348 = scalar_lea.vmem %s1, 24
      %v1349 = vld [vmem:[%s1348] sm:$0x1]
      %v1350 = vlaneseq
      %v1351 = vshrl.u32 %v1350, 7
      %v1352 = vsub.s32 0, %v1351
      %v1353 = vrot.slane %v1349, %v1352
      %v1354 = vmul.f32 %v304, %v1353
      %v1355 = vmul.f32 %v305, %v1353
      %v1356 = vmul.f32 %v306, %v1353
      %v1357 = vmul.f32 %v307, %v1353
      %v1358 = vadd.f32 %v1354, 0.0
      %v1359 = vadd.f32 %v1355, 0.0
      %v1360 = vadd.f32 %v1356, 0.0
      %v1361 = vadd.f32 %v1357, 0.0
      %v1362 = vld [vmem:[%s1348 + $0x1] sm:$0x1]
      %v1363 = vlaneseq
      %v1364 = vshrl.u32 %v1363, 7
      %v1365 = vsub.s32 0, %v1364
      %v1366 = vrot.slane %v1362, %v1365
      %v1367 = vmul.f32 %v304, %v1366
      %v1368 = vmul.f32 %v305, %v1366
      %v1369 = vmul.f32 %v306, %v1366
      %v1370 = vmul.f32 %v307, %v1366
      %v1375 = vrot.slane %v1367, 1
      %v1376 = vrot.slane %v1368, 1
      %v1377 = vrot.slane %v1369, 1
      %v1378 = vrot.slane %v1370, 1
      %v1383 = vadd.f32 %v1358, %v1375
      %v1384 = vadd.f32 %v1359, %v1376
      %v1385 = vadd.f32 %v1360, %v1377
      %v1386 = vadd.f32 %v1361, %v1378
      %v1387 = vld [vmem:[%s1348 + $0x2] sm:$0x1]
      %v1388 = vlaneseq
      %v1389 = vshrl.u32 %v1388, 7
      %v1390 = vsub.s32 0, %v1389
      %v1391 = vrot.slane %v1387, %v1390
      %v1392 = vmul.f32 %v304, %v1391
      %v1393 = vmul.f32 %v305, %v1391
      %v1394 = vmul.f32 %v306, %v1391
      %v1395 = vmul.f32 %v307, %v1391
      %v1400 = vrot.slane %v1392, 2
      %v1401 = vrot.slane %v1393, 2
      %v1402 = vrot.slane %v1394, 2
      %v1403 = vrot.slane %v1395, 2
      %v1408 = vadd.f32 %v1383, %v1400
      %v1409 = vadd.f32 %v1384, %v1401
      %v1410 = vadd.f32 %v1385, %v1402
      %v1411 = vadd.f32 %v1386, %v1403
      %s1412 = scalar_lea.vmem %s1, 28
      %v1413 = vld [vmem:[%s1412] sm:$0x1]
      %v1414 = vlaneseq
      %v1415 = vshrl.u32 %v1414, 7
      %v1416 = vsub.s32 0, %v1415
      %v1417 = vrot.slane %v1413, %v1416
      %v1418 = vmul.f32 %v305, %v1417
      %v1419 = vmul.f32 %v306, %v1417
      %v1420 = vmul.f32 %v307, %v1417
      %v1421 = vmul.f32 %v308, %v1417
      %v1422 = vadd.f32 %v1408, %v1418
      %v1423 = vadd.f32 %v1409, %v1419
      %v1424 = vadd.f32 %v1410, %v1420
      %v1425 = vadd.f32 %v1411, %v1421
      %v1426 = vld [vmem:[%s1412 + $0x1] sm:$0x1]
      %v1427 = vlaneseq
      %v1428 = vshrl.u32 %v1427, 7
      %v1429 = vsub.s32 0, %v1428
      %v1430 = vrot.slane %v1426, %v1429
      %v1431 = vmul.f32 %v305, %v1430
      %v1432 = vmul.f32 %v306, %v1430
      %v1433 = vmul.f32 %v307, %v1430
      %v1434 = vmul.f32 %v308, %v1430
      %v1439 = vrot.slane %v1431, 1
      %v1440 = vrot.slane %v1432, 1
      %v1441 = vrot.slane %v1433, 1
      %v1442 = vrot.slane %v1434, 1
      %v1447 = vadd.f32 %v1422, %v1439
      %v1448 = vadd.f32 %v1423, %v1440
      %v1449 = vadd.f32 %v1424, %v1441
      %v1450 = vadd.f32 %v1425, %v1442
      %v1451 = vld [vmem:[%s1412 + $0x2] sm:$0x1]
      %v1452 = vlaneseq
      %v1453 = vshrl.u32 %v1452, 7
      %v1454 = vsub.s32 0, %v1453
      %v1455 = vrot.slane %v1451, %v1454
      %v1456 = vmul.f32 %v305, %v1455
      %v1457 = vmul.f32 %v306, %v1455
      %v1458 = vmul.f32 %v307, %v1455
      %v1459 = vmul.f32 %v308, %v1455
      %v1464 = vrot.slane %v1456, 2
      %v1465 = vrot.slane %v1457, 2
      %v1466 = vrot.slane %v1458, 2
      %v1467 = vrot.slane %v1459, 2
      %v1472 = vadd.f32 %v1447, %v1464
      %v1473 = vadd.f32 %v1448, %v1465
      %v1474 = vadd.f32 %v1449, %v1466
      %v1475 = vadd.f32 %v1450, %v1467
      %s1476 = scalar_lea.vmem %s1, 32
      %v1477 = vld [vmem:[%s1476] sm:$0x1]
      %v1478 = vlaneseq
      %v1479 = vshrl.u32 %v1478, 7
      %v1480 = vsub.s32 0, %v1479
      %v1481 = vrot.slane %v1477, %v1480
      %v1482 = vmul.f32 %v306, %v1481
      %v1483 = vmul.f32 %v307, %v1481
      %v1484 = vmul.f32 %v308, %v1481
      %v1485 = vmul.f32 %v309, %v1481
      %v1486 = vadd.f32 %v1472, %v1482
      %v1487 = vadd.f32 %v1473, %v1483
      %v1488 = vadd.f32 %v1474, %v1484
      %v1489 = vadd.f32 %v1475, %v1485
      %v1490 = vld [vmem:[%s1476 + $0x1] sm:$0x1]
      %v1491 = vlaneseq
      %v1492 = vshrl.u32 %v1491, 7
      %v1493 = vsub.s32 0, %v1492
      %v1494 = vrot.slane %v1490, %v1493
      %v1495 = vmul.f32 %v306, %v1494
      %v1496 = vmul.f32 %v307, %v1494
      %v1497 = vmul.f32 %v308, %v1494
      %v1498 = vmul.f32 %v309, %v1494
      %v1503 = vrot.slane %v1495, 1
      %v1504 = vrot.slane %v1496, 1
      %v1505 = vrot.slane %v1497, 1
      %v1506 = vrot.slane %v1498, 1
      %v1511 = vadd.f32 %v1486, %v1503
      %v1512 = vadd.f32 %v1487, %v1504
      %v1513 = vadd.f32 %v1488, %v1505
      %v1514 = vadd.f32 %v1489, %v1506
      %v1515 = vld [vmem:[%s1476 + $0x2] sm:$0x1]
      %v1516 = vlaneseq
      %v1517 = vshrl.u32 %v1516, 7
      %v1518 = vsub.s32 0, %v1517
      %v1519 = vrot.slane %v1515, %v1518
      %v1520 = vmul.f32 %v306, %v1519
      %v1521 = vmul.f32 %v307, %v1519
      %v1522 = vmul.f32 %v308, %v1519
      %v1523 = vmul.f32 %v309, %v1519
      %v1528 = vrot.slane %v1520, 2
      %v1529 = vrot.slane %v1521, 2
      %v1530 = vrot.slane %v1522, 2
      %v1531 = vrot.slane %v1523, 2
      %v1536 = vadd.f32 %v1511, %v1528
      %v1537 = vadd.f32 %v1512, %v1529
      %v1538 = vadd.f32 %v1513, %v1530
      %v1539 = vadd.f32 %v1514, %v1531
      %s1540 = scalar_lea.vmem %s2, 2
      %v1541 = vld [vmem:[%s1540] sm:$0x1]
      %v1543 = vlaneseq
      %v1544 = vshrl.u32 %v1543, 7
      %v1545 = vsub.s32 0, %v1544
      %v1546 = vrot.slane %v1541, %v1545
      %v1548 = vadd.f32 %v1536, %v1546
      %v1549 = vadd.f32 %v1537, %v1546
      %v1550 = vadd.f32 %v1538, %v1546
      %v1551 = vadd.f32 %v1539, %v1546
      %v1552 = vmax.f32 %v1548, 0.0
      %v1553 = vmax.f32 %v1549, 0.0
      %v1554 = vmax.f32 %v1550, 0.0
      %v1555 = vmax.f32 %v1551, 0.0
      %s1556 = scalar_lea.vmem %s3, 64
      %v1557 = vld [vmem:[%s1556] sm:$0xff]
      %v1558 = vld [vmem:[%s1556 + $0x8] sm:$0xff]
      %v1559 = vld [vmem:[%s1556 + $0x10] sm:$0xff]
      %v1560 = vld [vmem:[%s1556 + $0x18] sm:$0xff]
      %s1561 = scalar_lea.vmem %s4, 2
      %v1562 = vld [vmem:[%s1561] sm:$0x1]
      %v1564 = vlaneseq
      %v1565 = vshrl.u32 %v1564, 7
      %v1566 = vsub.s32 0, %v1565
      %v1567 = vrot.slane %v1562, %v1566
      %v1570 = vsel %vm527, %v1552, 0
      %1572 = vmatprep.subr.mxu0 0.0
      %1573 = vmatpush1.msra.mxu0 0.0
      %1574 = vmatprep.subr.mxu0 0.0
      %1575 = vmatpush1.msra.mxu0 0.0
      %1576 = vmatprep.subr.mxu0 0.0
      %1577 = vmatpush1.msra.mxu0 0.0
      %1578 = vmatprep.subr.mxu0 0.0
      %1579 = vmatpush1.msra.mxu0 0.0
      %1580 = vmatprep.subr.mxu0 0.0
      %1581 = vmatpush1.msra.mxu0 0.0
      %1582 = vmatprep.subr.mxu0 0.0
      %1583 = vmatpush1.msra.mxu0 0.0
      %1584 = vmatprep.subr.mxu0 0.0
      %1585 = vmatpush1.msra.mxu0 0.0
      %1586 = vmatprep.subr.mxu0 0.0
      %1587 = vmatpush1.msra.mxu0 0.0
      %1588 = vmatprep.subr.mxu0 0.0
      %1589 = vmatpush1.msra.mxu0 0.0
      %1590 = vmatprep.subr.mxu0 0.0
      %1591 = vmatpush1.msra.mxu0 0.0
      %1592 = vmatprep.subr.mxu0 0.0
      %1593 = vmatpush1.msra.mxu0 0.0
      %1594 = vmatprep.subr.mxu0 0.0
      %1595 = vmatpush1.msra.mxu0 0.0
      %1596 = vmatprep.subr.mxu0 0.0
      %1597 = vmatpush1.msra.mxu0 %v1560
      %1598 = vmatprep.subr.mxu0 0.0
      %1599 = vmatpush1.msra.mxu0 %v1559
      %1600 = vmatprep.subr.mxu0 0.0
      %1601 = vmatpush1.msra.mxu0 %v1558
      %1602 = vmatprep.subr.mxu0 0.0
      %1603 = vmatpush1.msra.mxu0 %v1557
      %1604 = vmatprep.subr.mxu0 0.0
      %1605 = vmatpush2.msra.mxu0 0.0
      %1606 = vmatprep.subr.mxu0 0.0
      %1607 = vmatpush2.msra.mxu0 0.0
      %1608 = vmatprep.subr.mxu0 0.0
      %1609 = vmatpush2.msra.mxu0 0.0
      %1610 = vmatprep.subr.mxu0 0.0
      %1611 = vmatpush2.msra.mxu0 0.0
      %1612 = vmatprep.subr.mxu0 0.0
      %1613 = vmatpush2.msra.mxu0 0.0
      %1614 = vmatprep.subr.mxu0 0.0
      %1615 = vmatpush2.msra.mxu0 0.0
      %1616 = vmatprep.subr.mxu0 0.0
      %1617 = vmatpush2.msra.mxu0 0.0
      %1618 = vmatprep.subr.mxu0 0.0
      %1619 = vmatpush2.msra.mxu0 0.0
      %1620 = vmatprep.subr.mxu0 0.0
      %1621 = vmatpush2.msra.mxu0 0.0
      %1622 = vmatprep.subr.mxu0 0.0
      %1623 = vmatpush2.msra.mxu0 0.0
      %1624 = vmatprep.subr.mxu0 0.0
      %1625 = vmatpush2.msra.mxu0 0.0
      %1626 = vmatprep.subr.mxu0 0.0
      %1627 = vmatpush2.msra.mxu0 0.0
      %1628 = vmatprep.subr.mxu0 0.0
      %1629 = vmatpush2.msra.mxu0 0.0
      %1630 = vmatprep.subr.mxu0 0.0
      %1631 = vmatpush2.msra.mxu0 0.0
      %1632 = vmatprep.subr.mxu0 0.0
      %1633 = vmatpush2.msra.mxu0 0.0
      %1634 = vmatprep.subr.mxu0 0.0
      %1635 = vmatpush2.msra.mxu0 0.0
      %1636 = vmatprep.mubr.f32.mxu0 0.0
      %1637 = vmatmul.mubr.f32.gmra.mxu0 %v1570
      %v1638 = vpop.f32.mrf.mxu0
      %v1639 = vadd.f32 %v1567, %v1638
      %v1640 = vpop.f32.mrf.mxu0
      %1641 = vdwg.mxu0
      %1642 = vst.msk [vmem:[%s303] sm:$0xf] %vm601, %v1639
      %v1644 = vsel %vm527, %v1553, 0
      %1646 = vmatprep.subr.mxu0 0.0
      %1647 = vmatpush1.msra.mxu0 0.0
      %1648 = vmatprep.subr.mxu0 0.0
      %1649 = vmatpush1.msra.mxu0 0.0
      %1650 = vmatprep.subr.mxu0 0.0
      %1651 = vmatpush1.msra.mxu0 0.0
      %1652 = vmatprep.subr.mxu0 0.0
      %1653 = vmatpush1.msra.mxu0 0.0
      %1654 = vmatprep.subr.mxu0 0.0
      %1655 = vmatpush1.msra.mxu0 0.0
      %1656 = vmatprep.subr.mxu0 0.0
      %1657 = vmatpush1.msra.mxu0 0.0
      %1658 = vmatprep.subr.mxu0 0.0
      %1659 = vmatpush1.msra.mxu0 0.0
      %1660 = vmatprep.subr.mxu0 0.0
      %1661 = vmatpush1.msra.mxu0 0.0
      %1662 = vmatprep.subr.mxu0 0.0
      %1663 = vmatpush1.msra.mxu0 0.0
      %1664 = vmatprep.subr.mxu0 0.0
      %1665 = vmatpush1.msra.mxu0 0.0
      %1666 = vmatprep.subr.mxu0 0.0
      %1667 = vmatpush1.msra.mxu0 0.0
      %1668 = vmatprep.subr.mxu0 0.0
      %1669 = vmatpush1.msra.mxu0 0.0
      %1670 = vmatprep.subr.mxu0 0.0
      %1671 = vmatpush1.msra.mxu0 %v1560
      %1672 = vmatprep.subr.mxu0 0.0
      %1673 = vmatpush1.msra.mxu0 %v1559
      %1674 = vmatprep.subr.mxu0 0.0
      %1675 = vmatpush1.msra.mxu0 %v1558
      %1676 = vmatprep.subr.mxu0 0.0
      %1677 = vmatpush1.msra.mxu0 %v1557
      %1678 = vmatprep.subr.mxu0 0.0
      %1679 = vmatpush2.msra.mxu0 0.0
      %1680 = vmatprep.subr.mxu0 0.0
      %1681 = vmatpush2.msra.mxu0 0.0
      %1682 = vmatprep.subr.mxu0 0.0
      %1683 = vmatpush2.msra.mxu0 0.0
      %1684 = vmatprep.subr.mxu0 0.0
      %1685 = vmatpush2.msra.mxu0 0.0
      %1686 = vmatprep.subr.mxu0 0.0
      %1687 = vmatpush2.msra.mxu0 0.0
      %1688 = vmatprep.subr.mxu0 0.0
      %1689 = vmatpush2.msra.mxu0 0.0
      %1690 = vmatprep.subr.mxu0 0.0
      %1691 = vmatpush2.msra.mxu0 0.0
      %1692 = vmatprep.subr.mxu0 0.0
      %1693 = vmatpush2.msra.mxu0 0.0
      %1694 = vmatprep.subr.mxu0 0.0
      %1695 = vmatpush2.msra.mxu0 0.0
      %1696 = vmatprep.subr.mxu0 0.0
      %1697 = vmatpush2.msra.mxu0 0.0
      %1698 = vmatprep.subr.mxu0 0.0
      %1699 = vmatpush2.msra.mxu0 0.0
      %1700 = vmatprep.subr.mxu0 0.0
      %1701 = vmatpush2.msra.mxu0 0.0
      %1702 = vmatprep.subr.mxu0 0.0
      %1703 = vmatpush2.msra.mxu0 0.0
      %1704 = vmatprep.subr.mxu0 0.0
      %1705 = vmatpush2.msra.mxu0 0.0
      %1706 = vmatprep.subr.mxu0 0.0
      %1707 = vmatpush2.msra.mxu0 0.0
      %1708 = vmatprep.subr.mxu0 0.0
      %1709 = vmatpush2.msra.mxu0 0.0
      %1710 = vmatprep.mubr.f32.mxu0 0.0
      %1711 = vmatmul.mubr.f32.gmra.mxu0 %v1644
      %v1712 = vpop.f32.mrf.mxu0
      %v1713 = vadd.f32 %v1567, %v1712
      %v1714 = vpop.f32.mrf.mxu0
      %1715 = vdwg.mxu0
      %s1716 = scalar_lea.vmem %s303, 4
      %1717 = vst.msk [vmem:[%s1716] sm:$0xf] %vm601, %v1713
      %v1719 = vsel %vm527, %v1554, 0
      %1721 = vmatprep.subr.mxu0 0.0
      %1722 = vmatpush1.msra.mxu0 0.0
      %1723 = vmatprep.subr.mxu0 0.0
      %1724 = vmatpush1.msra.mxu0 0.0
      %1725 = vmatprep.subr.mxu0 0.0
      %1726 = vmatpush1.msra.mxu0 0.0
      %1727 = vmatprep.subr.mxu0 0.0
      %1728 = vmatpush1.msra.mxu0 0.0
      %1729 = vmatprep.subr.mxu0 0.0
      %1730 = vmatpush1.msra.mxu0 0.0
      %1731 = vmatprep.subr.mxu0 0.0
      %1732 = vmatpush1.msra.mxu0 0.0
      %1733 = vmatprep.subr.mxu0 0.0
      %1734 = vmatpush1.msra.mxu0 0.0
      %1735 = vmatprep.subr.mxu0 0.0
      %1736 = vmatpush1.msra.mxu0 0.0
      %1737 = vmatprep.subr.mxu0 0.0
      %1738 = vmatpush1.msra.mxu0 0.0
      %1739 = vmatprep.subr.mxu0 0.0
      %1740 = vmatpush1.msra.mxu0 0.0
      %1741 = vmatprep.subr.mxu0 0.0
      %1742 = vmatpush1.msra.mxu0 0.0
      %1743 = vmatprep.subr.mxu0 0.0
      %1744 = vmatpush1.msra.mxu0 0.0
      %1745 = vmatprep.subr.mxu0 0.0
      %1746 = vmatpush1.msra.mxu0 %v1560
      %1747 = vmatprep.subr.mxu0 0.0
      %1748 = vmatpush1.msra.mxu0 %v1559
      %1749 = vmatprep.subr.mxu0 0.0
      %1750 = vmatpush1.msra.mxu0 %v1558
      %1751 = vmatprep.subr.mxu0 0.0
      %1752 = vmatpush1.msra.mxu0 %v1557
      %1753 = vmatprep.subr.mxu0 0.0
      %1754 = vmatpush2.msra.mxu0 0.0
      %1755 = vmatprep.subr.mxu0 0.0
      %1756 = vmatpush2.msra.mxu0 0.0
      %1757 = vmatprep.subr.mxu0 0.0
      %1758 = vmatpush2.msra.mxu0 0.0
      %1759 = vmatprep.subr.mxu0 0.0
      %1760 = vmatpush2.msra.mxu0 0.0
      %1761 = vmatprep.subr.mxu0 0.0
      %1762 = vmatpush2.msra.mxu0 0.0
      %1763 = vmatprep.subr.mxu0 0.0
      %1764 = vmatpush2.msra.mxu0 0.0
      %1765 = vmatprep.subr.mxu0 0.0
      %1766 = vmatpush2.msra.mxu0 0.0
      %1767 = vmatprep.subr.mxu0 0.0
      %1768 = vmatpush2.msra.mxu0 0.0
      %1769 = vmatprep.subr.mxu0 0.0
      %1770 = vmatpush2.msra.mxu0 0.0
      %1771 = vmatprep.subr.mxu0 0.0
      %1772 = vmatpush2.msra.mxu0 0.0
      %1773 = vmatprep.subr.mxu0 0.0
      %1774 = vmatpush2.msra.mxu0 0.0
      %1775 = vmatprep.subr.mxu0 0.0
      %1776 = vmatpush2.msra.mxu0 0.0
      %1777 = vmatprep.subr.mxu0 0.0
      %1778 = vmatpush2.msra.mxu0 0.0
      %1779 = vmatprep.subr.mxu0 0.0
      %1780 = vmatpush2.msra.mxu0 0.0
      %1781 = vmatprep.subr.mxu0 0.0
      %1782 = vmatpush2.msra.mxu0 0.0
      %1783 = vmatprep.subr.mxu0 0.0
      %1784 = vmatpush2.msra.mxu0 0.0
      %1785 = vmatprep.mubr.f32.mxu0 0.0
      %1786 = vmatmul.mubr.f32.gmra.mxu0 %v1719
      %v1787 = vpop.f32.mrf.mxu0
      %v1788 = vadd.f32 %v1567, %v1787
      %v1789 = vpop.f32.mrf.mxu0
      %1790 = vdwg.mxu0
      %s1791 = scalar_lea.vmem %s303, 8
      %1792 = vst.msk [vmem:[%s1791] sm:$0xf] %vm601, %v1788
      %v1794 = vsel %vm527, %v1555, 0
      %1796 = vmatprep.subr.mxu0 0.0
      %1797 = vmatpush1.msra.mxu0 0.0
      %1798 = vmatprep.subr.mxu0 0.0
      %1799 = vmatpush1.msra.mxu0 0.0
      %1800 = vmatprep.subr.mxu0 0.0
      %1801 = vmatpush1.msra.mxu0 0.0
      %1802 = vmatprep.subr.mxu0 0.0
      %1803 = vmatpush1.msra.mxu0 0.0
      %1804 = vmatprep.subr.mxu0 0.0
      %1805 = vmatpush1.msra.mxu0 0.0
      %1806 = vmatprep.subr.mxu0 0.0
      %1807 = vmatpush1.msra.mxu0 0.0
      %1808 = vmatprep.subr.mxu0 0.0
      %1809 = vmatpush1.msra.mxu0 0.0
      %1810 = vmatprep.subr.mxu0 0.0
      %1811 = vmatpush1.msra.mxu0 0.0
      %1812 = vmatprep.subr.mxu0 0.0
      %1813 = vmatpush1.msra.mxu0 0.0
      %1814 = vmatprep.subr.mxu0 0.0
      %1815 = vmatpush1.msra.mxu0 0.0
      %1816 = vmatprep.subr.mxu0 0.0
      %1817 = vmatpush1.msra.mxu0 0.0
      %1818 = vmatprep.subr.mxu0 0.0
      %1819 = vmatpush1.msra.mxu0 0.0
      %1820 = vmatprep.subr.mxu0 0.0
      %1821 = vmatpush1.msra.mxu0 %v1560
      %1822 = vmatprep.subr.mxu0 0.0
      %1823 = vmatpush1.msra.mxu0 %v1559
      %1824 = vmatprep.subr.mxu0 0.0
      %1825 = vmatpush1.msra.mxu0 %v1558
      %1826 = vmatprep.subr.mxu0 0.0
      %1827 = vmatpush1.msra.mxu0 %v1557
      %1828 = vmatprep.subr.mxu0 0.0
      %1829 = vmatpush2.msra.mxu0 0.0
      %1830 = vmatprep.subr.mxu0 0.0
      %1831 = vmatpush2.msra.mxu0 0.0
      %1832 = vmatprep.subr.mxu0 0.0
      %1833 = vmatpush2.msra.mxu0 0.0
      %1834 = vmatprep.subr.mxu0 0.0
      %1835 = vmatpush2.msra.mxu0 0.0
      %1836 = vmatprep.subr.mxu0 0.0
      %1837 = vmatpush2.msra.mxu0 0.0
      %1838 = vmatprep.subr.mxu0 0.0
      %1839 = vmatpush2.msra.mxu0 0.0
      %1840 = vmatprep.subr.mxu0 0.0
      %1841 = vmatpush2.msra.mxu0 0.0
      %1842 = vmatprep.subr.mxu0 0.0
      %1843 = vmatpush2.msra.mxu0 0.0
      %1844 = vmatprep.subr.mxu0 0.0
      %1845 = vmatpush2.msra.mxu0 0.0
      %1846 = vmatprep.subr.mxu0 0.0
      %1847 = vmatpush2.msra.mxu0 0.0
      %1848 = vmatprep.subr.mxu0 0.0
      %1849 = vmatpush2.msra.mxu0 0.0
      %1850 = vmatprep.subr.mxu0 0.0
      %1851 = vmatpush2.msra.mxu0 0.0
      %1852 = vmatprep.subr.mxu0 0.0
      %1853 = vmatpush2.msra.mxu0 0.0
      %1854 = vmatprep.subr.mxu0 0.0
      %1855 = vmatpush2.msra.mxu0 0.0
      %1856 = vmatprep.subr.mxu0 0.0
      %1857 = vmatpush2.msra.mxu0 0.0
      %1858 = vmatprep.subr.mxu0 0.0
      %1859 = vmatpush2.msra.mxu0 0.0
      %1860 = vmatprep.mubr.f32.mxu0 0.0
      %1861 = vmatmul.mubr.f32.gmra.mxu0 %v1794
      %v1862 = vpop.f32.mrf.mxu0
      %v1863 = vadd.f32 %v1567, %v1862
      %v1864 = vpop.f32.mrf.mxu0
      %1865 = vdwg.mxu0
      %s1866 = scalar_lea.vmem %s303, 12
      %1867 = vst.msk [vmem:[%s1866] sm:$0xf] %vm601, %v1863
      %p1868 = scmp.lt.s32.totalorder %s19, 1
      %s1869 = scalar_select %p1868, %s19, 1
      %s1870 = smul.addr %s1869, 4
      %s1871 = smul.addr %s1870, 4
      %s1872 = scalar_lea.vmem %s5, %s1871
      %p1873 = scmp.lt.s32.totalorder %s19, 1
      %s1874 = scalar_select %p1873, %s19, 1
      %s1875 = smul.addr %s1874, 4
      %s1876 = smul.addr %s1875, 4
      %s1877 = scalar_lea.vmem %s6, %s1876
      %p1878 = scmp.lt.s32.totalorder %s19, 1
      %s1879 = scalar_select %p1878, %s19, 1
      %s1880 = smul.addr %s1879, 4
      %s1881 = smul.addr %s1880, 4
      %s1882 = scalar_lea.vmem %s7, %s1881
      // Predicated region
      $region41: #{conv_projection_forward.1} parent=39 // pred_check
        %p1883 = pneg %p147
      $region42: #{conv_projection_forward.1} parent=39 // pred_check_branch
        %1885 = sbr.rel (%p1883) target = $region44
      $region43: #{conv_projection_forward.1} parent=39 // pred_region
        _
      $region44: #{conv_projection_forward.1} parent=39 // pred_fallthru
        _
      // Predicated region
      $region45: #{conv_projection_forward.1} parent=39 // pred_check
        %p1886 = pneg %p173
      $region46: #{conv_projection_forward.1} parent=39 // pred_check_branch
        %1888 = sbr.rel (%p1886) target = $region48
      $region47: #{conv_projection_forward.1} parent=39 // pred_region
        _
      $region48: #{conv_projection_forward.1} parent=39 // pred_fallthru
        _
      // Predicated region
      $region49: #{conv_projection_forward.1} parent=39 // pred_check
        %p1889 = pneg %p199
      $region50: #{conv_projection_forward.1} parent=39 // pred_check_branch
        %1891 = sbr.rel (%p1889) target = $region52
      $region51: #{conv_projection_forward.1} parent=39 // pred_region
        _
      $region52: #{conv_projection_forward.1} parent=39 // pred_fallthru
        _
    $region40: #{conv_projection_forward.1} parent=5 // pred_fallthru
      _
    %p1892 = scmp.le.s32.totalorder 2, %s14
    // Predicated region
    $region53: #{conv_projection_forward.1} parent=5 // pred_check
      %p1893 = pneg %p1892
    $region54: #{conv_projection_forward.1} parent=5 // pred_check_branch
      %1895 = sbr.rel (%p1893) target = $region56
    $region55: #{conv_projection_forward.1} parent=5 // pred_region
      %s1896 = ssub.s32 %s14, 2
      // Predicated region
      $region57: #{conv_projection_forward.1} parent=55 // pred_check
        %p1897 = pneg %p153
      $region58: #{conv_projection_forward.1} parent=55 // pred_check_branch
        %1899 = sbr.rel (%p1897) target = $region60
      $region59: #{conv_projection_forward.1} parent=55 // pred_region
        %p1900 = scmp.lt.s32.totalorder %s20, 1
        %s1901 = scalar_select %p1900, %s20, 1
        %s1902 = smul.addr %s1901, 4
        %s1903 = smul.addr %s1902, 4
        %s1904 = scalar_lea.vmem %s5, %s1903
      $region60: #{conv_projection_forward.1} parent=55 // pred_fallthru
        _
      // Predicated region
      $region61: #{conv_projection_forward.1} parent=55 // pred_check
        %p1905 = pneg %p179
      $region62: #{conv_projection_forward.1} parent=55 // pred_check_branch
        %1907 = sbr.rel (%p1905) target = $region64
      $region63: #{conv_projection_forward.1} parent=55 // pred_region
        %p1908 = scmp.lt.s32.totalorder %s20, 1
        %s1909 = scalar_select %p1908, %s20, 1
        %s1910 = smul.addr %s1909, 4
        %s1911 = smul.addr %s1910, 4
        %s1912 = scalar_lea.vmem %s6, %s1911
      $region64: #{conv_projection_forward.1} parent=55 // pred_fallthru
        _
      // Predicated region
      $region65: #{conv_projection_forward.1} parent=55 // pred_check
        %p1913 = pneg %p205
      $region66: #{conv_projection_forward.1} parent=55 // pred_check_branch
        %1915 = sbr.rel (%p1913) target = $region68
      $region67: #{conv_projection_forward.1} parent=55 // pred_region
        %p1916 = scmp.lt.s32.totalorder %s20, 1
        %s1917 = scalar_select %p1916, %s20, 1
        %s1918 = smul.addr %s1917, 4
        %s1919 = smul.addr %s1918, 4
        %s1920 = scalar_lea.vmem %s7, %s1919
      $region68: #{conv_projection_forward.1} parent=55 // pred_fallthru
        _
    $region56: #{conv_projection_forward.1} parent=5 // pred_fallthru
      _
  $region6: #{conv_projection_forward.1} parent=0 // loop_footer
    %s18 = sadd.s32 1, %s14
  $region7: #{conv_projection_forward.1} parent=0 // loop_footer_branch
    %13 = sbr.rel target = $region3
  $region8: #{conv_projection_forward.1} parent=0 // loop_exit
    _

</llo_original>
